<compile_context>
chip_gen: v7x
topology: tpu7x:2x2x1
jax: 0.10.0
libtpu: 0.0.40
codegen_flags: <defaults>
</compile_context>

<pallas_src>
import functools

import jax
import jax.numpy as jnp
from jax.experimental import pallas as pl
from jax.experimental.pallas import tpu as pltpu

LANE = 128
MXU_N = 256          # N-dim granularity for the wide (2x256^2) MXUs on v6e/v7x
SUBLANE = 8


def _round_up(x, m):
    return (x + m - 1) // m * m


def _tpu_vmem_capacity_bytes(default=64 * 1024 * 1024):
    """Best-effort query of per-core VMEM capacity (trace-time only)."""
    try:
        info = pltpu.get_tpu_info()
        cap = getattr(info, "vmem_capacity_bytes", None)
        if cap:
            return int(cap)
    except Exception:
        pass
    return default


# ---------------------------------------------------------------------------
# Kernel: the whole forward (fc1->relu->[fc21|fc22]->reparam->fc3->relu->fc4->
# sigmoid) for one batch tile.  All feature dims are already lane-padded.
# ---------------------------------------------------------------------------
def vae_kernel(x_ref, eps_ref,
               w1_ref, b1_ref,
               w2_ref, b2_ref,       # fused fc21|fc22 : (Hp, 2*Lp)
               w3_ref, b3_ref,
               w4_ref, b4_ref,
               recon_ref, mulv_ref,
               *, latent_p):
    mxu_dtype = w1_ref.dtype         # bf16: MXU inputs; accumulation stays f32

    x = x_ref[...]

    # ---- encode ----
    h1 = jnp.dot(x.astype(mxu_dtype), w1_ref[...],
                 preferred_element_type=jnp.float32) + b1_ref[...]
    h1 = jnp.maximum(h1, 0.0)                                        # relu (f32)

    # fused encoder head: one MXU push produces [mu | logvar]
    mulv = jnp.dot(h1.astype(mxu_dtype), w2_ref[...],
                   preferred_element_type=jnp.float32) + b2_ref[...]
    mu = mulv[:, :latent_p]          # static slices at a 128-lane boundary
    logvar = mulv[:, latent_p:]

    # ---- reparameterize (f32 elementwise / EUP) ----
    z = mu + eps_ref[...] * jnp.exp(0.5 * logvar)

    # ---- decode ----
    h3 = jnp.dot(z.astype(mxu_dtype), w3_ref[...],
                 preferred_element_type=jnp.float32) + b3_ref[...]
    h3 = jnp.maximum(h3, 0.0)                                        # relu (f32)
    logits = jnp.dot(h3.astype(mxu_dtype), w4_ref[...],
                     preferred_element_type=jnp.float32) + b4_ref[...]
    recon = jax.nn.sigmoid(logits)

    recon_ref[...] = recon.astype(recon_ref.dtype)
    mulv_ref[...] = mulv.astype(mulv_ref.dtype)


# ---------------------------------------------------------------------------
# Padded-layout entry point (no wrapper-side pad / slice): callers with large
# batches can keep activations in this layout end-to-end across calls.
# ---------------------------------------------------------------------------
@functools.partial(jax.jit, static_argnames=("block_b",))
def vae_forward_padded(xp, epsp, pp, *, block_b):
    """xp: (Bp, Dp) f32, epsp: (Bp, Lp) f32, pp: packed params. Bp % block_b == 0."""
    Bp, dp = xp.shape
    lp = epsp.shape[1]
    hp = pp["w1"].shape[1]

    grid = (Bp // block_b,)

    def bcast(shape):                 # grid-invariant parameter block
        # Buffered(1): weights never change block index -> no double-buffering,
        # halves their VMEM footprint (key on v7x's 64 MiB VMEM).
        return pl.BlockSpec(shape, lambda i: (0, 0), pipeline_mode=pl.Buffered(1))

    in_specs = [
        pl.BlockSpec((block_b, dp), lambda i: (i, 0)),     # x
        pl.BlockSpec((block_b, lp), lambda i: (i, 0)),     # eps
        bcast(pp["w1"].shape), bcast(pp["b1"].shape),
        bcast(pp["w2"].shape), bcast(pp["b2"].shape),
        bcast(pp["w3"].shape), bcast(pp["b3"].shape),
        bcast(pp["w4"].shape), bcast(pp["b4"].shape),
    ]
    out_specs = [
        pl.BlockSpec((block_b, dp), lambda i: (i, 0)),       # recon (lane-dense)
        pl.BlockSpec((block_b, 2 * lp), lambda i: (i, 0)),   # [mu | logvar] slab
    ]
    out_shape = [
        jax.ShapeDtypeStruct((Bp, dp), jnp.float32),
        jax.ShapeDtypeStruct((Bp, 2 * lp), jnp.float32),
    ]

    # Advisory cost: weights counted once (bf16), biases f32, both output slabs.
    weight_elems = dp * hp + hp * 2 * lp + lp * hp + hp * dp
    bias_elems = hp + 2 * lp + hp + dp
    cost = pl.CostEstimate(
        flops=2 * Bp * weight_elems,
        transcendentals=Bp * (lp + dp),                      # exp + sigmoid
        bytes_accessed=(4 * (Bp * dp + Bp * lp)              # x, eps in
                        + 2 * weight_elems + 4 * bias_elems  # params (once)
                        + 4 * (Bp * dp + Bp * 2 * lp)),      # recon + mu|logvar out
    )

    # Generation-aware VMEM limit: ~75% of physical (48 MiB on v7x's 64 MiB,
    # 96 MiB on v5e/v6e's 128 MiB) leaves headroom for Mosaic internal scratch.
    vmem_cap = _tpu_vmem_capacity_bytes()
    vmem_limit = min(vmem_cap - vmem_cap // 4, 100 * 1024 * 1024)

    recon_p, mulv_p = pl.pallas_call(
        functools.partial(vae_kernel, latent_p=lp),
        grid_spec=pltpu.PrefetchScalarGridSpec(
            num_scalar_prefetch=0,
            grid=grid,
            in_specs=in_specs,
            out_specs=out_specs,
        ),
        out_shape=out_shape,
        compiler_params=pltpu.CompilerParams(
            dimension_semantics=("parallel",),    # batch axis shards over TCs on v7x
            vmem_limit_bytes=vmem_limit,
        ),
        cost_estimate=cost,
    )(xp, epsp,
      pp["w1"], pp["b1"], pp["w2"], pp["b2"],
      pp["w3"], pp["b3"], pp["w4"], pp["b4"])

    return recon_p, mulv_p


# ---------------------------------------------------------------------------
# Convenience wrapper for unpadded user data (one-time pad / slice).
# ---------------------------------------------------------------------------
def vae_forward(x, eps, pp, *, block_b=None):
    """x: (B, input_dim), eps: (B, latent_dim), pp: packed/padded params."""
    B, input_dim = x.shape
    latent_dim = eps.shape[1]
    dp, hp = pp["w1"].shape           # padded input / hidden dims
    lp = pp["w3"].shape[0]            # padded latent dim

    if block_b is None:
        # >=2 grid steps so both TensorCores get work on v7x; larger caps on
        # v5e/v6e (128 MiB VMEM, 1 TC) to amortize per-step overhead.
        vmem_cap = _tpu_vmem_capacity_bytes()
        cap_rows = 512 if vmem_cap >= 96 * 1024 * 1024 else 256
        block_b = min(cap_rows, max(SUBLANE, _round_up(-(-B // 2), SUBLANE)))
    Bp = _round_up(B, block_b)

    # Zero-pad activations to the padded/lane-dense layout (padding rows/cols
    # are exact zeros, so results in the valid region are unchanged).
    xp = jnp.zeros((Bp, dp), jnp.float32).at[:B, :input_dim].set(x)
    epsp = jnp.zeros((Bp, lp), jnp.float32).at[:B, :latent_dim].set(eps)

    recon_p, mulv_p = vae_forward_padded(xp, epsp, pp, block_b=block_b)

    recon = recon_p[:B, :input_dim]
    mu = mulv_p[:B, :latent_dim]
    logvar = mulv_p[:B, lp:lp + latent_dim]
    return recon, mu, logvar


# ---------------------------------------------------------------------------
# Parameter init (PyTorch-like, unpadded) and one-time packing (pad + fuse)
# ---------------------------------------------------------------------------
def init_params(key, input_dim, hidden_dim, latent_dim):
    """Deterministic synthetic init.  Weights stored as (in, out), f32."""
    ks = jax.random.split(key, 10)

    def linear(kw, kb, fan_in, fan_out):
        bound = 1.0 / jnp.sqrt(fan_in)
        w = jax.random.uniform(kw, (fan_in, fan_out), jnp.float32, -bound, bound)
        b = jax.random.uniform(kb, (1, fan_out), jnp.float32, -bound, bound)
        return w, b

    w1, b1 = linear(ks[0], ks[1], input_dim, hidden_dim)
    w21, b21 = linear(ks[2], ks[3], hidden_dim, latent_dim)
    w22, b22 = linear(ks[4], ks[5], hidden_dim, latent_dim)
    w3, b3 = linear(ks[6], ks[7], latent_dim, hidden_dim)
    w4, b4 = linear(ks[8], ks[9], hidden_dim, input_dim)
    return dict(w1=w1, b1=b1, w21=w21, b21=b21, w22=w22, b22=b22,
                w3=w3, b3=b3, w4=w4, b4=b4)


def pack_params(p, input_dim, hidden_dim, latent_dim):
    """One-time layout plumbing: zero-pad feature dims (input/hidden to 256 for
    the wide MXU N dims, latent to 128), fuse fc21|fc22 into one (Hp, 2*Lp)
    weight, and store weights in bf16 (MXU input dtype).  Biases stay f32."""
    dp = _round_up(input_dim, MXU_N)
    hp = _round_up(hidden_dim, MXU_N)
    lp = _round_up(latent_dim, LANE)       # 2*lp is then a multiple of 256

    def padw(w, in_p, out_p):
        out = jnp.zeros((in_p, out_p), jnp.float32).at[:w.shape[0], :w.shape[1]].set(w)
        return out.astype(jnp.bfloat16)

    def padb(b, out_p):
        return jnp.zeros((1, out_p), jnp.float32).at[:, :b.shape[1]].set(b)

    w2 = (jnp.zeros((hp, 2 * lp), jnp.float32)
          .at[:hidden_dim, :latent_dim].set(p["w21"])
          .at[:hidden_dim, lp:lp + latent_dim].set(p["w22"])).astype(jnp.bfloat16)
    b2 = (jnp.zeros((1, 2 * lp), jnp.float32)
          .at[:, :latent_dim].set(p["b21"])
          .at[:, lp:lp + latent_dim].set(p["b22"]))

    return dict(
        w1=padw(p["w1"], dp, hp), b1=padb(p["b1"], hp),
        w2=w2, b2=b2,
        w3=padw(p["w3"], lp, hp), b3=padb(p["b3"], hp),
        w4=padw(p["w4"], hp, dp), b4=padb(p["b4"], dp),
    )


def vae_forward_ref(x, eps, p):
    """Pure-JAX f32 reference mirroring the PyTorch forward (unpadded params)."""
    h1 = jax.nn.relu(x @ p["w1"] + p["b1"])
    mu = h1 @ p["w21"] + p["b21"]
    logvar = h1 @ p["w22"] + p["b22"]
    z = mu + eps * jnp.exp(0.5 * logvar)
    h3 = jax.nn.relu(z @ p["w3"] + p["b3"])
    recon = jax.nn.sigmoid(h3 @ p["w4"] + p["b4"])
    return recon, mu, logvar


if __name__ == "__main__":
    B, INPUT_DIM, HIDDEN_DIM, LATENT_DIM = 16, 16, 32, 8

    key = jax.random.PRNGKey(0)
    k_x, k_eps, k_p = jax.random.split(key, 3)

    x = jax.random.uniform(k_x, (B, INPUT_DIM), jnp.float32)       # BCE-style inputs in [0,1)
    eps = jax.random.normal(k_eps, (B, LATENT_DIM), jnp.float32)   # the randn_like sample
    params = init_params(k_p, INPUT_DIM, HIDDEN_DIM, LATENT_DIM)
    packed = pack_params(params, INPUT_DIM, HIDDEN_DIM, LATENT_DIM)

    recon, mu, logvar = vae_forward(x, eps, packed)
    jax.block_until_ready((recon, mu, logvar))

    # sanity-check against a pure-JAX f32 reference (bf16 MXU inputs => looser tol)
    recon_r, mu_r, logvar_r = vae_forward_ref(x, eps, params)
    assert jnp.allclose(recon, recon_r, atol=2e-2, rtol=2e-2)
    assert jnp.allclose(mu, mu_r, atol=2e-2, rtol=2e-2)
    assert jnp.allclose(logvar, logvar_r, atol=2e-2, rtol=2e-2)

    print("KERNEL_OK")
</pallas_src>

<mosaic_0001>
module attributes {stable_mosaic.version = 11 : i64} {
  func.func @vae_kernel(%arg0: i32, %arg1: memref<8x256xf32, #tpu.memory_space<vmem>>, %arg2: memref<8x128xf32, #tpu.memory_space<vmem>>, %arg3: memref<256x256xbf16, #tpu.memory_space<vmem>>, %arg4: memref<1x256xf32, #tpu.memory_space<vmem>>, %arg5: memref<256x256xbf16, #tpu.memory_space<vmem>>, %arg6: memref<1x256xf32, #tpu.memory_space<vmem>>, %arg7: memref<128x256xbf16, #tpu.memory_space<vmem>>, %arg8: memref<1x256xf32, #tpu.memory_space<vmem>>, %arg9: memref<256x256xbf16, #tpu.memory_space<vmem>>, %arg10: memref<1x256xf32, #tpu.memory_space<vmem>>, %arg11: memref<8x256xf32, #tpu.memory_space<vmem>>, %arg12: memref<8x256xf32, #tpu.memory_space<vmem>>) attributes {dimension_semantics = [#tpu.dimension_semantics<parallel>], iteration_bounds = array<i64: 2>, scalar_prefetch = 0 : i64, scratch_operands = 0 : i64, tpu.core_type = #tpu.core_type<tc>, window_params = [{transform_indices = @transform_0, window_bounds = array<i64: 8, 256>}, {transform_indices = @transform_1, window_bounds = array<i64: 8, 128>}, {pipeline_mode = #tpu.pipeline_mode<synchronous>, transform_indices = @transform_2, window_bounds = array<i64: 256, 256>}, {pipeline_mode = #tpu.pipeline_mode<synchronous>, transform_indices = @transform_3, window_bounds = array<i64: 1, 256>}, {pipeline_mode = #tpu.pipeline_mode<synchronous>, transform_indices = @transform_4, window_bounds = array<i64: 256, 256>}, {pipeline_mode = #tpu.pipeline_mode<synchronous>, transform_indices = @transform_5, window_bounds = array<i64: 1, 256>}, {pipeline_mode = #tpu.pipeline_mode<synchronous>, transform_indices = @transform_6, window_bounds = array<i64: 128, 256>}, {pipeline_mode = #tpu.pipeline_mode<synchronous>, transform_indices = @transform_7, window_bounds = array<i64: 1, 256>}, {pipeline_mode = #tpu.pipeline_mode<synchronous>, transform_indices = @transform_8, window_bounds = array<i64: 256, 256>}, {pipeline_mode = #tpu.pipeline_mode<synchronous>, transform_indices = @transform_9, window_bounds = array<i64: 1, 256>}, {transform_indices = @transform_10, window_bounds = array<i64: 8, 256>}, {transform_indices = @transform_11, window_bounds = array<i64: 8, 256>}]} {
    %c0 = arith.constant 0 : index
    %c0_0 = arith.constant 0 : index
    %0 = vector.load %arg1[%c0, %c0_0] : memref<8x256xf32, #tpu.memory_space<vmem>>, vector<8x256xf32>
    %1 = arith.truncf %0 : vector<8x256xf32> to vector<8x256xbf16>
    %c0_1 = arith.constant 0 : index
    %c0_2 = arith.constant 0 : index
    %2 = vector.load %arg3[%c0_1, %c0_2] : memref<256x256xbf16, #tpu.memory_space<vmem>>, vector<256x256xbf16>
    %cst = arith.constant dense<0.000000e+00> : vector<8x256xf32>
    %3 = tpu.matmul %1, %2, %cst {dimension_numbers = #tpu.dot_dimension_numbers<[1], [0], [0], [1], [0, 0, 1, 1], [], []>} : vector<8x256xbf16>, vector<256x256xbf16>, vector<8x256xf32> -> vector<8x256xf32>
    %c0_3 = arith.constant 0 : index
    %c0_4 = arith.constant 0 : index
    %4 = vector.load %arg4[%c0_3, %c0_4] : memref<1x256xf32, #tpu.memory_space<vmem>>, vector<1x256xf32>
    %5 = vector.broadcast %4 : vector<1x256xf32> to vector<8x256xf32>
    %6 = arith.addf %3, %5 : vector<8x256xf32>
    %cst_5 = arith.constant 0.000000e+00 : f32
    %7 = vector.broadcast %cst_5 : f32 to vector<8x256xf32>
    %8 = arith.maximumf %6, %7 : vector<8x256xf32>
    %9 = arith.truncf %8 : vector<8x256xf32> to vector<8x256xbf16>
    %c0_6 = arith.constant 0 : index
    %c0_7 = arith.constant 0 : index
    %10 = vector.load %arg5[%c0_6, %c0_7] : memref<256x256xbf16, #tpu.memory_space<vmem>>, vector<256x256xbf16>
    %cst_8 = arith.constant dense<0.000000e+00> : vector<8x256xf32>
    %11 = tpu.matmul %9, %10, %cst_8 {dimension_numbers = #tpu.dot_dimension_numbers<[1], [0], [0], [1], [0, 0, 1, 1], [], []>} : vector<8x256xbf16>, vector<256x256xbf16>, vector<8x256xf32> -> vector<8x256xf32>
    %c0_9 = arith.constant 0 : index
    %c0_10 = arith.constant 0 : index
    %12 = vector.load %arg6[%c0_9, %c0_10] : memref<1x256xf32, #tpu.memory_space<vmem>>, vector<1x256xf32>
    %13 = vector.broadcast %12 : vector<1x256xf32> to vector<8x256xf32>
    %14 = arith.addf %11, %13 : vector<8x256xf32>
    %15 = vector.extract_strided_slice %14 {offsets = [0, 0], sizes = [8, 128], strides = [1, 1]} : vector<8x256xf32> to vector<8x128xf32>
    %16 = vector.extract_strided_slice %14 {offsets = [0, 128], sizes = [8, 128], strides = [1, 1]} : vector<8x256xf32> to vector<8x128xf32>
    %c0_11 = arith.constant 0 : index
    %c0_12 = arith.constant 0 : index
    %17 = vector.load %arg2[%c0_11, %c0_12] : memref<8x128xf32, #tpu.memory_space<vmem>>, vector<8x128xf32>
    %cst_13 = arith.constant 5.000000e-01 : f32
    %18 = vector.broadcast %cst_13 : f32 to vector<8x128xf32>
    %19 = arith.mulf %18, %16 : vector<8x128xf32>
    %20 = math.exp %19 : vector<8x128xf32>
    %21 = arith.mulf %17, %20 : vector<8x128xf32>
    %22 = arith.addf %15, %21 : vector<8x128xf32>
    %23 = arith.truncf %22 : vector<8x128xf32> to vector<8x128xbf16>
    %c0_14 = arith.constant 0 : index
    %c0_15 = arith.constant 0 : index
    %24 = vector.load %arg7[%c0_14, %c0_15] : memref<128x256xbf16, #tpu.memory_space<vmem>>, vector<128x256xbf16>
    %cst_16 = arith.constant dense<0.000000e+00> : vector<8x256xf32>
    %25 = tpu.matmul %23, %24, %cst_16 {dimension_numbers = #tpu.dot_dimension_numbers<[1], [0], [0], [1], [0, 0, 1, 1], [], []>} : vector<8x128xbf16>, vector<128x256xbf16>, vector<8x256xf32> -> vector<8x256xf32>
    %c0_17 = arith.constant 0 : index
    %c0_18 = arith.constant 0 : index
    %26 = vector.load %arg8[%c0_17, %c0_18] : memref<1x256xf32, #tpu.memory_space<vmem>>, vector<1x256xf32>
    %27 = vector.broadcast %26 : vector<1x256xf32> to vector<8x256xf32>
    %28 = arith.addf %25, %27 : vector<8x256xf32>
    %cst_19 = arith.constant 0.000000e+00 : f32
    %29 = vector.broadcast %cst_19 : f32 to vector<8x256xf32>
    %30 = arith.maximumf %28, %29 : vector<8x256xf32>
    %31 = arith.truncf %30 : vector<8x256xf32> to vector<8x256xbf16>
    %c0_20 = arith.constant 0 : index
    %c0_21 = arith.constant 0 : index
    %32 = vector.load %arg9[%c0_20, %c0_21] : memref<256x256xbf16, #tpu.memory_space<vmem>>, vector<256x256xbf16>
    %cst_22 = arith.constant dense<0.000000e+00> : vector<8x256xf32>
    %33 = tpu.matmul %31, %32, %cst_22 {dimension_numbers = #tpu.dot_dimension_numbers<[1], [0], [0], [1], [0, 0, 1, 1], [], []>} : vector<8x256xbf16>, vector<256x256xbf16>, vector<8x256xf32> -> vector<8x256xf32>
    %c0_23 = arith.constant 0 : index
    %c0_24 = arith.constant 0 : index
    %34 = vector.load %arg10[%c0_23, %c0_24] : memref<1x256xf32, #tpu.memory_space<vmem>>, vector<1x256xf32>
    %35 = vector.broadcast %34 : vector<1x256xf32> to vector<8x256xf32>
    %36 = arith.addf %33, %35 : vector<8x256xf32>
    %37 = arith.negf %36 : vector<8x256xf32>
    %38 = math.exp %37 : vector<8x256xf32>
    %cst_25 = arith.constant 1.000000e+00 : f32
    %39 = vector.broadcast %cst_25 : f32 to vector<8x256xf32>
    %40 = arith.addf %39, %38 : vector<8x256xf32>
    %41 = arith.divf %39, %40 : vector<8x256xf32>
    %c0_26 = arith.constant 0 : index
    %c0_27 = arith.constant 0 : index
    %42 = vector.load %arg11[%c0_26, %c0_27] : memref<8x256xf32, #tpu.memory_space<vmem>>, vector<8x256xf32>
    tpu.vector_store %arg11[%c0_26, %c0_27], %41 {strides = array<i32>} : memref<8x256xf32, #tpu.memory_space<vmem>>, vector<8x256xf32>,
    %c0_28 = arith.constant 0 : index
    %c0_29 = arith.constant 0 : index
    %43 = vector.load %arg12[%c0_28, %c0_29] : memref<8x256xf32, #tpu.memory_space<vmem>>, vector<8x256xf32>
    tpu.vector_store %arg12[%c0_28, %c0_29], %14 {strides = array<i32>} : memref<8x256xf32, #tpu.memory_space<vmem>>, vector<8x256xf32>,
    return
  }
  func.func @transform_0(%arg0: i32) -> (i32, i32) {
    %c0_i32 = arith.constant 0 : i32
    %c0_i32_0 = arith.constant 0 : i32
    return %arg0, %c0_i32 : i32, i32
  }
  func.func @transform_1(%arg0: i32) -> (i32, i32) {
    %c0_i32 = arith.constant 0 : i32
    %c0_i32_0 = arith.constant 0 : i32
    return %arg0, %c0_i32 : i32, i32
  }
  func.func @transform_2(%arg0: i32) -> (i32, i32) {
    %c0_i32 = arith.constant 0 : i32
    %c0_i32_0 = arith.constant 0 : i32
    %c0_i32_1 = arith.constant 0 : i32
    return %c0_i32, %c0_i32_0 : i32, i32
  }
  func.func @transform_3(%arg0: i32) -> (i32, i32) {
    %c0_i32 = arith.constant 0 : i32
    %c0_i32_0 = arith.constant 0 : i32
    %c0_i32_1 = arith.constant 0 : i32
    return %c0_i32, %c0_i32_0 : i32, i32
  }
  func.func @transform_4(%arg0: i32) -> (i32, i32) {
    %c0_i32 = arith.constant 0 : i32
    %c0_i32_0 = arith.constant 0 : i32
    %c0_i32_1 = arith.constant 0 : i32
    return %c0_i32, %c0_i32_0 : i32, i32
  }
  func.func @transform_5(%arg0: i32) -> (i32, i32) {
    %c0_i32 = arith.constant 0 : i32
    %c0_i32_0 = arith.constant 0 : i32
    %c0_i32_1 = arith.constant 0 : i32
    return %c0_i32, %c0_i32_0 : i32, i32
  }
  func.func @transform_6(%arg0: i32) -> (i32, i32) {
    %c0_i32 = arith.constant 0 : i32
    %c0_i32_0 = arith.constant 0 : i32
    %c0_i32_1 = arith.constant 0 : i32
    return %c0_i32, %c0_i32_0 : i32, i32
  }
  func.func @transform_7(%arg0: i32) -> (i32, i32) {
    %c0_i32 = arith.constant 0 : i32
    %c0_i32_0 = arith.constant 0 : i32
    %c0_i32_1 = arith.constant 0 : i32
    return %c0_i32, %c0_i32_0 : i32, i32
  }
  func.func @transform_8(%arg0: i32) -> (i32, i32) {
    %c0_i32 = arith.constant 0 : i32
    %c0_i32_0 = arith.constant 0 : i32
    %c0_i32_1 = arith.constant 0 : i32
    return %c0_i32, %c0_i32_0 : i32, i32
  }
  func.func @transform_9(%arg0: i32) -> (i32, i32) {
    %c0_i32 = arith.constant 0 : i32
    %c0_i32_0 = arith.constant 0 : i32
    %c0_i32_1 = arith.constant 0 : i32
    return %c0_i32, %c0_i32_0 : i32, i32
  }
  func.func @transform_10(%arg0: i32) -> (i32, i32) {
    %c0_i32 = arith.constant 0 : i32
    %c0_i32_0 = arith.constant 0 : i32
    return %arg0, %c0_i32 : i32, i32
  }
  func.func @transform_11(%arg0: i32) -> (i32, i32) {
    %c0_i32 = arith.constant 0 : i32
    %c0_i32_0 = arith.constant 0 : i32
    return %arg0, %c0_i32 : i32, i32
  }
}

</mosaic_0001>

<llo_original>
// kernel: vae_forward_padded.1
$region0: #{vae_forward_padded.1}
  #allocation0 [shape = 'u32[]', space=smem, size = 0x4, offset = 0x4, fixed_abs, tag = 'smem constant byte address 0x4 - core index']
  #allocation1 [shape = 'u32[144,128]{1,0:T(1,128)}', space=vmem, size = 0x12000, scoped, tag = 'internal scratch']
  %s0 = inlined_call_operand.hbm [shape: f32[16,256], index: 0, kind: input, shape index: {}]
  %s1 = inlined_call_operand.hbm [shape: f32[16,128], index: 1, kind: input, shape index: {}]
  %s2 = inlined_call_operand.hbm [shape: bf16[256,256], index: 2, kind: input, shape index: {}]
  %s3 = inlined_call_operand.vmem [shape: f32[1,256], index: 3, kind: input, shape index: {}]
  %s4 = inlined_call_operand.hbm [shape: bf16[256,256], index: 4, kind: input, shape index: {}]
  %s5 = inlined_call_operand.vmem [shape: f32[1,256], index: 5, kind: input, shape index: {}]
  %s6 = inlined_call_operand.hbm [shape: bf16[128,256], index: 6, kind: input, shape index: {}]
  %s7 = inlined_call_operand.vmem [shape: f32[1,256], index: 7, kind: input, shape index: {}]
  %s8 = inlined_call_operand.hbm [shape: bf16[256,256], index: 8, kind: input, shape index: {}]
  %s9 = inlined_call_operand.vmem [shape: f32[1,256], index: 9, kind: input, shape index: {}]
  %s10 = inlined_call_operand.hbm [shape: f32[16,256], index: 10, kind: output, shape index: {0}]
  %s11 = inlined_call_operand.hbm [shape: f32[16,256], index: 11, kind: output, shape index: {1}]
  %12 = xla_tuple %s10, %s11
  %s13 = sld [smem:[#allocation0]]
  $region105: #{vae_forward_padded.1} parent=0
    _
  %s15 = ssub.s32 1, %s13
  %s16 = scalar_select 0, %s15, %s13
  $region1: #{vae_forward_padded.1} parent=0
    #allocation2 [shape = 'u8[16384]{0}', space=vmem, size = 0x4000, scoped, tag = 'input window, operand 0']
    #allocation3 [shape = 's32[2]{0}', space=sflag, size = 0x8, scoped, tag = 'scoped memory for vae_forward_padded.1']
    #allocation4 [shape = 's32[2]{0}', space=sflag, size = 0x8, scoped, tag = 'scoped memory for vae_forward_padded.1']
    #allocation5 [shape = 'u8[8192]{0}', space=vmem, size = 0x2000, scoped, tag = 'input window, operand 1']
    #allocation6 [shape = 's32[2]{0}', space=sflag, size = 0x8, scoped, tag = 'scoped memory for vae_forward_padded.1']
    #allocation7 [shape = 'u8[131072]{0}', space=vmem, size = 0x20000, scoped, tag = 'input window, operand 2, single buffered']
    #allocation8 [shape = 'u8[131072]{0}', space=vmem, size = 0x20000, scoped, tag = 'input window, operand 4, single buffered']
    #allocation9 [shape = 's32[1]{0}', space=sflag, size = 0x4, scoped, tag = 'scoped memory for vae_forward_padded.1']
    #allocation10 [shape = 'u8[65536]{0}', space=vmem, size = 0x10000, scoped, tag = 'input window, operand 6, single buffered']
    #allocation11 [shape = 'u8[131072]{0}', space=vmem, size = 0x20000, scoped, tag = 'input window, operand 8, single buffered']
    #allocation12 [shape = 's32[1]{0}', space=sflag, size = 0x4, scoped, tag = 'scoped memory for vae_forward_padded.1']
    #allocation13 [shape = 'u8[16384]{0}', space=vmem, size = 0x4000, scoped, tag = 'output window, operand 0']
    #allocation14 [shape = 'u8[16384]{0}', space=vmem, size = 0x4000, scoped, tag = 'output window, operand 1']
    #allocation15 [shape = 's32[2]{0}', space=sflag, size = 0x8, scoped, tag = 'scoped memory for vae_forward_padded.1']
    %17 = vsyncpa [#allocation3], 0
    %s18 = scalar_lea.sflag [#allocation3], 1
    %19 = vsyncpa %s18, 0
    %20 = vsyncpa [#allocation6], 0
    %s21 = scalar_lea.sflag [#allocation6], 1
    %22 = vsyncpa %s21, 0
    %23 = vsyncpa [#allocation9], 0
    %24 = vsyncpa [#allocation12], 0
    %25 = vsyncpa [#allocation4], 0
    %s26 = scalar_lea.sflag [#allocation4], 1
    %27 = vsyncpa %s26, 0
    %28 = vsyncpa [#allocation15], 0
    %s29 = scalar_lea.sflag [#allocation15], 1
    %30 = vsyncpa %s29, 0
    loop: start=0, step=1, limit=4
    $region2: #{vae_forward_padded.1} parent=1 // loop_pre_header
      _
    $region3: #{vae_forward_padded.1} parent=1 // loop_header
      %s32 = sphi 0, %s36
      %p33 = scmp.ge.s32.totalorder %s32, 4
      %s42 = sphi 0, %s44
      %s45 = sphi 0, %s42
      %s46 = sphi 0, %s45
      %s62 = sphi 0, %s46
      %s68 = sphi 0, %s70
      %s71 = sphi 0, %s68
      %s72 = sphi 0, %s71
      %s88 = sphi 0, %s72
      %s92 = sphi 0, %s92
      %s94 = sphi 0, %s92
      %s95 = sphi 0, %s94
      %s109 = sphi 0, %s95
      %s113 = sphi 0, %s113
      %s115 = sphi 0, %s113
      %s116 = sphi 0, %s115
      %s130 = sphi 0, %s116
      %s134 = sphi 0, %s134
      %s136 = sphi 0, %s134
      %s137 = sphi 0, %s136
      %s151 = sphi 0, %s137
      %s155 = sphi 0, %s155
      %s157 = sphi 0, %s155
      %s158 = sphi 0, %s157
      %s172 = sphi 0, %s158
      %s176 = sphi 0, %s176
      %s178 = sphi 0, %s176
      %s179 = sphi 0, %s178
      %s193 = sphi 0, %s179
      %s197 = sphi 0, %s197
      %s199 = sphi 0, %s197
      %s200 = sphi 0, %s199
      %s214 = sphi 0, %s200
      %s218 = sphi 0, %s218
      %s220 = sphi 0, %s218
      %s221 = sphi 0, %s220
      %s235 = sphi 0, %s221
      %s239 = sphi 0, %s239
      %s241 = sphi 0, %s239
      %s242 = sphi 0, %s241
      %s256 = sphi 0, %s242
      %s262 = sphi 0, %s264
      %s265 = sphi 0, %s262
      %s266 = sphi 0, %s265
      %s282 = sphi 0, %s266
      %s288 = sphi 0, %s290
      %s291 = sphi 0, %s288
      %s292 = sphi 0, %s291
      %s308 = sphi 0, %s292
    $region4: #{vae_forward_padded.1} parent=1 // loop_header_branch
      %35 = sbr.rel (%p33) target = $region8
    $region5: #{vae_forward_padded.1} parent=1 // loop_body
      %s37 = ssub.s32 %s32, 1
      %s38 = ssub.s32 %s32, 2
      %s39 = sadd.s32 %s32, 1
      %s40 = ssub.s32 %s32, %s39
      %p41 = scmp.eq.s32.totalorder %s40, 0
      %s43 = sadd.s32 %s42, 1
      %s44 = scalar_select %p41, %s42, %s43
      %p47 = pneg %p41
      %p48 = scmp.eq.s32.totalorder %s32, 1
      %p49 = por %p47, %p48
      %p50 = scmp.ne.s32.totalorder %s42, %s45
      %p51 = scmp.eq.s32.totalorder %s32, 0
      %p52 = por %p50, %p51
      %p53 = scmp.ne.s32.totalorder %s42, %s45
      %p54 = scmp.eq.s32.totalorder %s37, 1
      %p55 = por %p53, %p54
      %p56 = scmp.ne.s32.totalorder %s45, %s46
      %p57 = scmp.eq.s32.totalorder %s37, 0
      %p58 = por %p56, %p57
      %p59 = scmp.ne.s32.totalorder %s45, %s46
      %p60 = scmp.eq.s32.totalorder %s38, 1
      %p61 = por %p59, %p60
      %p63 = scmp.ne.s32.totalorder %s46, %s62
      %p64 = scmp.eq.s32.totalorder %s38, 0
      %p65 = por %p63, %p64
      %s66 = ssub.s32 %s32, %s39
      %p67 = scmp.eq.s32.totalorder %s66, 0
      %s69 = sadd.s32 %s68, 1
      %s70 = scalar_select %p67, %s68, %s69
      %p73 = pneg %p67
      %p74 = scmp.eq.s32.totalorder %s32, 1
      %p75 = por %p73, %p74
      %p76 = scmp.ne.s32.totalorder %s68, %s71
      %p77 = scmp.eq.s32.totalorder %s32, 0
      %p78 = por %p76, %p77
      %p79 = scmp.ne.s32.totalorder %s68, %s71
      %p80 = scmp.eq.s32.totalorder %s37, 1
      %p81 = por %p79, %p80
      %p82 = scmp.ne.s32.totalorder %s71, %s72
      %p83 = scmp.eq.s32.totalorder %s37, 0
      %p84 = por %p82, %p83
      %p85 = scmp.ne.s32.totalorder %s71, %s72
      %p86 = scmp.eq.s32.totalorder %s38, 1
      %p87 = por %p85, %p86
      %p89 = scmp.ne.s32.totalorder %s72, %s88
      %p90 = scmp.eq.s32.totalorder %s38, 0
      %p91 = por %p89, %p90
      %s93 = sadd.s32 %s92, 1
      %p96 = scmp.eq.s32.totalorder %s32, 1
      %p97 = scmp.ne.s32.totalorder %s92, %s94
      %p98 = scmp.eq.s32.totalorder %s32, 0
      %p99 = por %p97, %p98
      %p100 = scmp.ne.s32.totalorder %s92, %s94
      %p101 = scmp.eq.s32.totalorder %s37, 1
      %p102 = por %p100, %p101
      %p103 = scmp.ne.s32.totalorder %s94, %s95
      %p104 = scmp.eq.s32.totalorder %s37, 0
      %p105 = por %p103, %p104
      %p106 = scmp.ne.s32.totalorder %s94, %s95
      %p107 = scmp.eq.s32.totalorder %s38, 1
      %p108 = por %p106, %p107
      %p110 = scmp.ne.s32.totalorder %s95, %s109
      %p111 = scmp.eq.s32.totalorder %s38, 0
      %p112 = por %p110, %p111
      %s114 = sadd.s32 %s113, 1
      %p117 = scmp.eq.s32.totalorder %s32, 1
      %p118 = scmp.ne.s32.totalorder %s113, %s115
      %p119 = scmp.eq.s32.totalorder %s32, 0
      %p120 = por %p118, %p119
      %p121 = scmp.ne.s32.totalorder %s113, %s115
      %p122 = scmp.eq.s32.totalorder %s37, 1
      %p123 = por %p121, %p122
      %p124 = scmp.ne.s32.totalorder %s115, %s116
      %p125 = scmp.eq.s32.totalorder %s37, 0
      %p126 = por %p124, %p125
      %p127 = scmp.ne.s32.totalorder %s115, %s116
      %p128 = scmp.eq.s32.totalorder %s38, 1
      %p129 = por %p127, %p128
      %p131 = scmp.ne.s32.totalorder %s116, %s130
      %p132 = scmp.eq.s32.totalorder %s38, 0
      %p133 = por %p131, %p132
      %s135 = sadd.s32 %s134, 1
      %p138 = scmp.eq.s32.totalorder %s32, 1
      %p139 = scmp.ne.s32.totalorder %s134, %s136
      %p140 = scmp.eq.s32.totalorder %s32, 0
      %p141 = por %p139, %p140
      %p142 = scmp.ne.s32.totalorder %s134, %s136
      %p143 = scmp.eq.s32.totalorder %s37, 1
      %p144 = por %p142, %p143
      %p145 = scmp.ne.s32.totalorder %s136, %s137
      %p146 = scmp.eq.s32.totalorder %s37, 0
      %p147 = por %p145, %p146
      %p148 = scmp.ne.s32.totalorder %s136, %s137
      %p149 = scmp.eq.s32.totalorder %s38, 1
      %p150 = por %p148, %p149
      %p152 = scmp.ne.s32.totalorder %s137, %s151
      %p153 = scmp.eq.s32.totalorder %s38, 0
      %p154 = por %p152, %p153
      %s156 = sadd.s32 %s155, 1
      %p159 = scmp.eq.s32.totalorder %s32, 1
      %p160 = scmp.ne.s32.totalorder %s155, %s157
      %p161 = scmp.eq.s32.totalorder %s32, 0
      %p162 = por %p160, %p161
      %p163 = scmp.ne.s32.totalorder %s155, %s157
      %p164 = scmp.eq.s32.totalorder %s37, 1
      %p165 = por %p163, %p164
      %p166 = scmp.ne.s32.totalorder %s157, %s158
      %p167 = scmp.eq.s32.totalorder %s37, 0
      %p168 = por %p166, %p167
      %p169 = scmp.ne.s32.totalorder %s157, %s158
      %p170 = scmp.eq.s32.totalorder %s38, 1
      %p171 = por %p169, %p170
      %p173 = scmp.ne.s32.totalorder %s158, %s172
      %p174 = scmp.eq.s32.totalorder %s38, 0
      %p175 = por %p173, %p174
      %s177 = sadd.s32 %s176, 1
      %p180 = scmp.eq.s32.totalorder %s32, 1
      %p181 = scmp.ne.s32.totalorder %s176, %s178
      %p182 = scmp.eq.s32.totalorder %s32, 0
      %p183 = por %p181, %p182
      %p184 = scmp.ne.s32.totalorder %s176, %s178
      %p185 = scmp.eq.s32.totalorder %s37, 1
      %p186 = por %p184, %p185
      %p187 = scmp.ne.s32.totalorder %s178, %s179
      %p188 = scmp.eq.s32.totalorder %s37, 0
      %p189 = por %p187, %p188
      %p190 = scmp.ne.s32.totalorder %s178, %s179
      %p191 = scmp.eq.s32.totalorder %s38, 1
      %p192 = por %p190, %p191
      %p194 = scmp.ne.s32.totalorder %s179, %s193
      %p195 = scmp.eq.s32.totalorder %s38, 0
      %p196 = por %p194, %p195
      %s198 = sadd.s32 %s197, 1
      %p201 = scmp.eq.s32.totalorder %s32, 1
      %p202 = scmp.ne.s32.totalorder %s197, %s199
      %p203 = scmp.eq.s32.totalorder %s32, 0
      %p204 = por %p202, %p203
      %p205 = scmp.ne.s32.totalorder %s197, %s199
      %p206 = scmp.eq.s32.totalorder %s37, 1
      %p207 = por %p205, %p206
      %p208 = scmp.ne.s32.totalorder %s199, %s200
      %p209 = scmp.eq.s32.totalorder %s37, 0
      %p210 = por %p208, %p209
      %p211 = scmp.ne.s32.totalorder %s199, %s200
      %p212 = scmp.eq.s32.totalorder %s38, 1
      %p213 = por %p211, %p212
      %p215 = scmp.ne.s32.totalorder %s200, %s214
      %p216 = scmp.eq.s32.totalorder %s38, 0
      %p217 = por %p215, %p216
      %s219 = sadd.s32 %s218, 1
      %p222 = scmp.eq.s32.totalorder %s32, 1
      %p223 = scmp.ne.s32.totalorder %s218, %s220
      %p224 = scmp.eq.s32.totalorder %s32, 0
      %p225 = por %p223, %p224
      %p226 = scmp.ne.s32.totalorder %s218, %s220
      %p227 = scmp.eq.s32.totalorder %s37, 1
      %p228 = por %p226, %p227
      %p229 = scmp.ne.s32.totalorder %s220, %s221
      %p230 = scmp.eq.s32.totalorder %s37, 0
      %p231 = por %p229, %p230
      %p232 = scmp.ne.s32.totalorder %s220, %s221
      %p233 = scmp.eq.s32.totalorder %s38, 1
      %p234 = por %p232, %p233
      %p236 = scmp.ne.s32.totalorder %s221, %s235
      %p237 = scmp.eq.s32.totalorder %s38, 0
      %p238 = por %p236, %p237
      %s240 = sadd.s32 %s239, 1
      %p243 = scmp.eq.s32.totalorder %s32, 1
      %p244 = scmp.ne.s32.totalorder %s239, %s241
      %p245 = scmp.eq.s32.totalorder %s32, 0
      %p246 = por %p244, %p245
      %p247 = scmp.ne.s32.totalorder %s239, %s241
      %p248 = scmp.eq.s32.totalorder %s37, 1
      %p249 = por %p247, %p248
      %p250 = scmp.ne.s32.totalorder %s241, %s242
      %p251 = scmp.eq.s32.totalorder %s37, 0
      %p252 = por %p250, %p251
      %p253 = scmp.ne.s32.totalorder %s241, %s242
      %p254 = scmp.eq.s32.totalorder %s38, 1
      %p255 = por %p253, %p254
      %p257 = scmp.ne.s32.totalorder %s242, %s256
      %p258 = scmp.eq.s32.totalorder %s38, 0
      %p259 = por %p257, %p258
      %s260 = ssub.s32 %s32, %s39
      %p261 = scmp.eq.s32.totalorder %s260, 0
      %s263 = sadd.s32 %s262, 1
      %s264 = scalar_select %p261, %s262, %s263
      %p267 = pneg %p261
      %p268 = scmp.eq.s32.totalorder %s32, 1
      %p269 = por %p267, %p268
      %p270 = scmp.ne.s32.totalorder %s262, %s265
      %p271 = scmp.eq.s32.totalorder %s32, 0
      %p272 = por %p270, %p271
      %p273 = scmp.ne.s32.totalorder %s262, %s265
      %p274 = scmp.eq.s32.totalorder %s37, 1
      %p275 = por %p273, %p274
      %p276 = scmp.ne.s32.totalorder %s265, %s266
      %p277 = scmp.eq.s32.totalorder %s37, 0
      %p278 = por %p276, %p277
      %p279 = scmp.ne.s32.totalorder %s265, %s266
      %p280 = scmp.eq.s32.totalorder %s38, 1
      %p281 = por %p279, %p280
      %p283 = scmp.ne.s32.totalorder %s266, %s282
      %p284 = scmp.eq.s32.totalorder %s38, 0
      %p285 = por %p283, %p284
      %s286 = ssub.s32 %s32, %s39
      %p287 = scmp.eq.s32.totalorder %s286, 0
      %s289 = sadd.s32 %s288, 1
      %s290 = scalar_select %p287, %s288, %s289
      %p293 = pneg %p287
      %p294 = scmp.eq.s32.totalorder %s32, 1
      %p295 = por %p293, %p294
      %p296 = scmp.ne.s32.totalorder %s288, %s291
      %p297 = scmp.eq.s32.totalorder %s32, 0
      %p298 = por %p296, %p297
      %p299 = scmp.ne.s32.totalorder %s288, %s291
      %p300 = scmp.eq.s32.totalorder %s37, 1
      %p301 = por %p299, %p300
      %p302 = scmp.ne.s32.totalorder %s291, %s292
      %p303 = scmp.eq.s32.totalorder %s37, 0
      %p304 = por %p302, %p303
      %p305 = scmp.ne.s32.totalorder %s291, %s292
      %p306 = scmp.eq.s32.totalorder %s38, 1
      %p307 = por %p305, %p306
      %p309 = scmp.ne.s32.totalorder %s292, %s308
      %p310 = scmp.eq.s32.totalorder %s38, 0
      %p311 = por %p309, %p310
      %p312 = scmp.le.s32.totalorder 1, %s32
      %p313 = scmp.lt.s32.totalorder %s32, 3
      %p314 = pnand %p312, %p313
      %p315 = pneg %p314
      // Predicated region
      $region9: #{vae_forward_padded.1} parent=5 // pred_check
        _
      $region10: #{vae_forward_padded.1} parent=5 // pred_check_branch
        %317 = sbr.rel (%p314) target = $region12
      $region11: #{vae_forward_padded.1} parent=5 // pred_region
        %s318 = ssub.s32 %s32, 1
        // Predicated region
        $region13: #{vae_forward_padded.1} parent=11 // pred_check
          %p319 = pneg %p105
        $region14: #{vae_forward_padded.1} parent=11 // pred_check_branch
          %321 = sbr.rel (%p319) target = $region16
        $region15: #{vae_forward_padded.1} parent=11 // pred_region
          %s323 = ssub.s32 4096, 4096
          %324 = vsyncadd [#allocation6], %s323
          %s325 = sshll.u32 [#allocation7], 4
          %s326 = int_to_ptr.vmem [resolvable:$true] %s325
          %331 = dma.hbm_to_vmem [thread:$0]  %s2, 4096, %s326, [#allocation6], 128, 128, 8
        $region16: #{vae_forward_padded.1} parent=11 // pred_fallthru
          _
        // Predicated region
        $region17: #{vae_forward_padded.1} parent=11 // pred_check
          %p332 = pneg %p126
        $region18: #{vae_forward_padded.1} parent=11 // pred_check_branch
          %334 = sbr.rel (%p332) target = $region20
        $region19: #{vae_forward_padded.1} parent=11 // pred_region
          _
        $region20: #{vae_forward_padded.1} parent=11 // pred_fallthru
          _
        // Predicated region
        $region21: #{vae_forward_padded.1} parent=11 // pred_check
          %p335 = pneg %p147
        $region22: #{vae_forward_padded.1} parent=11 // pred_check_branch
          %337 = sbr.rel (%p335) target = $region24
        $region23: #{vae_forward_padded.1} parent=11 // pred_region
          %s339 = ssub.s32 4096, 4096
          %340 = vsyncadd [#allocation9], %s339
          %s341 = sshll.u32 [#allocation8], 4
          %s342 = int_to_ptr.vmem [resolvable:$true] %s341
          %347 = dma.hbm_to_vmem [thread:$0]  %s4, 4096, %s342, [#allocation9], 128, 128, 8
        $region24: #{vae_forward_padded.1} parent=11 // pred_fallthru
          _
        // Predicated region
        $region25: #{vae_forward_padded.1} parent=11 // pred_check
          %p348 = pneg %p168
        $region26: #{vae_forward_padded.1} parent=11 // pred_check_branch
          %350 = sbr.rel (%p348) target = $region28
        $region27: #{vae_forward_padded.1} parent=11 // pred_region
          _
        $region28: #{vae_forward_padded.1} parent=11 // pred_fallthru
          _
        // Predicated region
        $region29: #{vae_forward_padded.1} parent=11 // pred_check
          %p351 = pneg %p189
        $region30: #{vae_forward_padded.1} parent=11 // pred_check_branch
          %353 = sbr.rel (%p351) target = $region32
        $region31: #{vae_forward_padded.1} parent=11 // pred_region
          %s355 = ssub.s32 2048, 2048
          %356 = vsyncadd [#allocation9], %s355
          %s357 = sshll.u32 [#allocation10], 4
          %s358 = int_to_ptr.vmem [resolvable:$true] %s357
          %363 = dma.hbm_to_vmem [thread:$0]  %s6, 2048, %s358, [#allocation9], 128, 128, 8
        $region32: #{vae_forward_padded.1} parent=11 // pred_fallthru
          _
        // Predicated region
        $region33: #{vae_forward_padded.1} parent=11 // pred_check
          %p364 = pneg %p210
        $region34: #{vae_forward_padded.1} parent=11 // pred_check_branch
          %366 = sbr.rel (%p364) target = $region36
        $region35: #{vae_forward_padded.1} parent=11 // pred_region
          _
        $region36: #{vae_forward_padded.1} parent=11 // pred_fallthru
          _
        // Predicated region
        $region37: #{vae_forward_padded.1} parent=11 // pred_check
          %p367 = pneg %p231
        $region38: #{vae_forward_padded.1} parent=11 // pred_check_branch
          %369 = sbr.rel (%p367) target = $region40
        $region39: #{vae_forward_padded.1} parent=11 // pred_region
          %s371 = ssub.s32 4096, 4096
          %372 = vsyncadd [#allocation12], %s371
          %s373 = sshll.u32 [#allocation11], 4
          %s374 = int_to_ptr.vmem [resolvable:$true] %s373
          %379 = dma.hbm_to_vmem [thread:$0]  %s8, 4096, %s374, [#allocation12], 128, 128, 8
        $region40: #{vae_forward_padded.1} parent=11 // pred_fallthru
          _
        // Predicated region
        $region41: #{vae_forward_padded.1} parent=11 // pred_check
          %p380 = pneg %p252
        $region42: #{vae_forward_padded.1} parent=11 // pred_check_branch
          %382 = sbr.rel (%p380) target = $region44
        $region43: #{vae_forward_padded.1} parent=11 // pred_region
          _
        $region44: #{vae_forward_padded.1} parent=11 // pred_fallthru
          _
      $region12: #{vae_forward_padded.1} parent=5 // pred_fallthru
        _
      %p383 = scmp.lt.s32.totalorder %s32, 2
      // Predicated region
      $region45: #{vae_forward_padded.1} parent=5 // pred_check
        %p384 = pneg %p383
      $region46: #{vae_forward_padded.1} parent=5 // pred_check_branch
        %386 = sbr.rel (%p384) target = $region48
      $region47: #{vae_forward_padded.1} parent=5 // pred_region
        // Predicated region
        $region49: #{vae_forward_padded.1} parent=47 // pred_check
          %p387 = pneg %p52
        $region50: #{vae_forward_padded.1} parent=47 // pred_check_branch
          %389 = sbr.rel (%p387) target = $region52
        $region51: #{vae_forward_padded.1} parent=47 // pred_region
          %s390 = sand.u32 %s42, 1
          %s391 = scalar_lea.sflag [#allocation3], %s390
          %s392 = sand.u32 %s42, 1
          %s393 = smul.addr %s392, 16
          %s394 = scalar_lea.vmem [#allocation2], %s393
          %s396 = ssub.s32 256, 256
          %397 = vsyncadd %s391, %s396
          %s398 = smul.addr %s32, 2
          %s399 = smul.addr %s398, 128
          %s400 = scalar_lea.hbm %s0, %s399
          %s402 = sshll.u32 %s394, 4
          %s403 = int_to_ptr.vmem [resolvable:$true] %s402
          %405 = dma.hbm_to_vmem [thread:$0]  %s400, 256, %s403, %s391
        $region52: #{vae_forward_padded.1} parent=47 // pred_fallthru
          _
        // Predicated region
        $region53: #{vae_forward_padded.1} parent=47 // pred_check
          %p406 = pneg %p78
        $region54: #{vae_forward_padded.1} parent=47 // pred_check_branch
          %408 = sbr.rel (%p406) target = $region56
        $region55: #{vae_forward_padded.1} parent=47 // pred_region
          %s409 = sand.u32 %s32, 1
          %s410 = scalar_lea.sflag [#allocation6], %s409
          %s411 = sand.u32 %s68, 1
          %s412 = smul.addr %s411, 8
          %s413 = scalar_lea.vmem [#allocation5], %s412
          %s415 = ssub.s32 128, 128
          %416 = vsyncadd %s410, %s415
          %s417 = smul.addr %s32, 128
          %s418 = scalar_lea.hbm %s1, %s417
          %s420 = sshll.u32 %s413, 4
          %s421 = int_to_ptr.vmem [resolvable:$true] %s420
          %423 = dma.hbm_to_vmem [thread:$0]  %s418, 128, %s421, %s410
        $region56: #{vae_forward_padded.1} parent=47 // pred_fallthru
          _
      $region48: #{vae_forward_padded.1} parent=5 // pred_fallthru
        _
      %p424 = scmp.le.s32.totalorder 1, %s32
      %p425 = scmp.lt.s32.totalorder %s32, 3
      %p426 = pnand %p424, %p425
      %p427 = pneg %p426
      // Predicated region
      $region57: #{vae_forward_padded.1} parent=5 // pred_check
        _
      $region58: #{vae_forward_padded.1} parent=5 // pred_check_branch
        %429 = sbr.rel (%p426) target = $region60
      $region59: #{vae_forward_padded.1} parent=5 // pred_region
        %s430 = ssub.s32 %s32, 1
        %s431 = sand.u32 %s45, 1
        %s432 = scalar_lea.sflag [#allocation3], %s431
        %s433 = sand.u32 %s45, 1
        %s434 = smul.addr %s433, 16
        %s435 = scalar_lea.vmem [#allocation2], %s434
        // Predicated region
        $region61: #{vae_forward_padded.1} parent=59 // pred_check
          %p436 = pneg %p58
        $region62: #{vae_forward_padded.1} parent=59 // pred_check_branch
          %438 = sbr.rel (%p436) target = $region64
        $region63: #{vae_forward_padded.1} parent=59 // pred_region
          %439 = dma.done %s432, 256
        $region64: #{vae_forward_padded.1} parent=59 // pred_fallthru
          _
        %s440 = sand.u32 %s37, 1
        %s441 = scalar_lea.sflag [#allocation6], %s440
        %s442 = sand.u32 %s71, 1
        %s443 = smul.addr %s442, 8
        %s444 = scalar_lea.vmem [#allocation5], %s443
        // Predicated region
        $region65: #{vae_forward_padded.1} parent=59 // pred_check
          %p445 = pneg %p84
        $region66: #{vae_forward_padded.1} parent=59 // pred_check_branch
          %447 = sbr.rel (%p445) target = $region68
        $region67: #{vae_forward_padded.1} parent=59 // pred_region
          %448 = dma.done %s441, 128
        $region68: #{vae_forward_padded.1} parent=59 // pred_fallthru
          _
        // Predicated region
        $region69: #{vae_forward_padded.1} parent=59 // pred_check
          %p449 = pneg %p105
        $region70: #{vae_forward_padded.1} parent=59 // pred_check_branch
          %451 = sbr.rel (%p449) target = $region72
        $region71: #{vae_forward_padded.1} parent=59 // pred_region
          %452 = dma.done [#allocation6], 4096
        $region72: #{vae_forward_padded.1} parent=59 // pred_fallthru
          _
        // Predicated region
        $region73: #{vae_forward_padded.1} parent=59 // pred_check
          %p453 = pneg %p147
        $region74: #{vae_forward_padded.1} parent=59 // pred_check_branch
          %455 = sbr.rel (%p453) target = $region76
        $region75: #{vae_forward_padded.1} parent=59 // pred_region
          %456 = dma.done [#allocation9], 4096
        $region76: #{vae_forward_padded.1} parent=59 // pred_fallthru
          _
        // Predicated region
        $region77: #{vae_forward_padded.1} parent=59 // pred_check
          %p457 = pneg %p189
        $region78: #{vae_forward_padded.1} parent=59 // pred_check_branch
          %459 = sbr.rel (%p457) target = $region80
        $region79: #{vae_forward_padded.1} parent=59 // pred_region
          %460 = dma.done [#allocation9], 2048
        $region80: #{vae_forward_padded.1} parent=59 // pred_fallthru
          _
        // Predicated region
        $region81: #{vae_forward_padded.1} parent=59 // pred_check
          %p461 = pneg %p231
        $region82: #{vae_forward_padded.1} parent=59 // pred_check_branch
          %463 = sbr.rel (%p461) target = $region84
        $region83: #{vae_forward_padded.1} parent=59 // pred_region
          %464 = dma.done [#allocation12], 4096
        $region84: #{vae_forward_padded.1} parent=59 // pred_fallthru
          _
        %s465 = sand.u32 %s45, 1
        %s466 = scalar_lea.sflag [#allocation3], %s465
        %s467 = sand.u32 %s45, 1
        %s468 = smul.addr %s467, 16
        %s469 = scalar_lea.vmem [#allocation2], %s468
        %p470 = pneg %p58
        %p471 = pneg %p55
        %s472 = sand.u32 %s37, 1
        %s473 = scalar_lea.sflag [#allocation6], %s472
        %s474 = sand.u32 %s71, 1
        %s475 = smul.addr %s474, 8
        %s476 = scalar_lea.vmem [#allocation5], %s475
        %p477 = pneg %p84
        %p478 = pneg %p81
        %p479 = pneg %p105
        %p480 = pneg %p102
        %p481 = pneg %p126
        %p482 = pneg %p123
        %p483 = pneg %p147
        %p484 = pneg %p144
        %p485 = pneg %p168
        %p486 = pneg %p165
        %p487 = pneg %p189
        %p488 = pneg %p186
        %p489 = pneg %p210
        %p490 = pneg %p207
        %p491 = pneg %p231
        %p492 = pneg %p228
        %p493 = pneg %p252
        %p494 = pneg %p249
        %p495 = pneg %p278
        %p496 = pneg %p275
        %s497 = sand.u32 %s265, 1
        %s498 = scalar_lea.sflag [#allocation4], %s497
        %s499 = sand.u32 %s265, 1
        %s500 = smul.addr %s499, 16
        %s501 = scalar_lea.vmem [#allocation13], %s500
        %p502 = pneg %p304
        %p503 = pneg %p301
        %s504 = sand.u32 %s291, 1
        %s505 = scalar_lea.sflag [#allocation15], %s504
        %s506 = sand.u32 %s291, 1
        %s507 = smul.addr %s506, 16
        %s508 = scalar_lea.vmem [#allocation14], %s507
        %v510 = vld [vmem:[%s435] sm:$0xff]
        %v511 = vld [vmem:[%s435 + $0x8] sm:$0xff]
        %v512 = vpack.c.bf16 %v510, %v510
        %v513 = vpack.c.bf16 %v511, %v511
        %v514 = vld [vmem:[#allocation7] sm:$0xff]
        %v515 = vld [vmem:[#allocation7 + $0x8] sm:$0xff]
        %v516 = vld [vmem:[#allocation7 + $0x10] sm:$0xff]
        %v517 = vld [vmem:[#allocation7 + $0x18] sm:$0xff]
        %v518 = vld [vmem:[#allocation7 + $0x20] sm:$0xff]
        %v519 = vld [vmem:[#allocation7 + $0x28] sm:$0xff]
        %v520 = vld [vmem:[#allocation7 + $0x30] sm:$0xff]
        %v521 = vld [vmem:[#allocation7 + $0x38] sm:$0xff]
        %v522 = vld [vmem:[#allocation7 + $0x40] sm:$0xff]
        %v523 = vld [vmem:[#allocation7 + $0x48] sm:$0xff]
        %v524 = vld [vmem:[#allocation7 + $0x50] sm:$0xff]
        %v525 = vld [vmem:[#allocation7 + $0x58] sm:$0xff]
        %v526 = vld [vmem:[#allocation7 + $0x60] sm:$0xff]
        %v527 = vld [vmem:[#allocation7 + $0x68] sm:$0xff]
        %v528 = vld [vmem:[#allocation7 + $0x70] sm:$0xff]
        %v529 = vld [vmem:[#allocation7 + $0x78] sm:$0xff]
        %v530 = vld [vmem:[#allocation7 + $0x80] sm:$0xff]
        %v531 = vld [vmem:[#allocation7 + $0x88] sm:$0xff]
        %v532 = vld [vmem:[#allocation7 + $0x90] sm:$0xff]
        %v533 = vld [vmem:[#allocation7 + $0x98] sm:$0xff]
        %v534 = vld [vmem:[#allocation7 + $0xa0] sm:$0xff]
        %v535 = vld [vmem:[#allocation7 + $0xa8] sm:$0xff]
        %v536 = vld [vmem:[#allocation7 + $0xb0] sm:$0xff]
        %v537 = vld [vmem:[#allocation7 + $0xb8] sm:$0xff]
        %v538 = vld [vmem:[#allocation7 + $0xc0] sm:$0xff]
        %v539 = vld [vmem:[#allocation7 + $0xc8] sm:$0xff]
        %v540 = vld [vmem:[#allocation7 + $0xd0] sm:$0xff]
        %v541 = vld [vmem:[#allocation7 + $0xd8] sm:$0xff]
        %v542 = vld [vmem:[#allocation7 + $0xe0] sm:$0xff]
        %v543 = vld [vmem:[#allocation7 + $0xe8] sm:$0xff]
        %v544 = vld [vmem:[#allocation7 + $0xf0] sm:$0xff]
        %v545 = vld [vmem:[#allocation7 + $0xf8] sm:$0xff]
        %v546 = vld [vmem:[%s3] sm:$0x3]
        %v548 = vlaneseq
        %v549 = vshrl.u32 %v548, 7
        %v550 = vsub.s32 0, %v549
        %v551 = vrot.slane %v546, %v550
        %v552 = vlaneseq
        %v553 = vshrl.u32 %v552, 7
        %v554 = vsub.s32 1, %v553
        %v555 = vrot.slane %v546, %v554
        %v590 = vunpack.c.l.b16 %v514
        %v591 = vunpack.c.h.b16 %v514
        %v592 = vunpack.c.l.b16 %v515
        %v593 = vunpack.c.h.b16 %v515
        %v594 = vunpack.c.l.b16 %v516
        %v595 = vunpack.c.h.b16 %v516
        %v596 = vunpack.c.l.b16 %v517
        %v597 = vunpack.c.h.b16 %v517
        %v598 = vunpack.c.l.b16 %v518
        %v599 = vunpack.c.h.b16 %v518
        %v600 = vunpack.c.l.b16 %v519
        %v601 = vunpack.c.h.b16 %v519
        %v602 = vunpack.c.l.b16 %v520
        %v603 = vunpack.c.h.b16 %v520
        %v604 = vunpack.c.l.b16 %v521
        %v605 = vunpack.c.h.b16 %v521
        %v606 = vunpack.c.l.b16 %v522
        %v607 = vunpack.c.h.b16 %v522
        %v608 = vunpack.c.l.b16 %v523
        %v609 = vunpack.c.h.b16 %v523
        %v610 = vunpack.c.l.b16 %v524
        %v611 = vunpack.c.h.b16 %v524
        %v612 = vunpack.c.l.b16 %v525
        %v613 = vunpack.c.h.b16 %v525
        %v614 = vunpack.c.l.b16 %v526
        %v615 = vunpack.c.h.b16 %v526
        %v616 = vunpack.c.l.b16 %v527
        %v617 = vunpack.c.h.b16 %v527
        %v618 = vunpack.c.l.b16 %v528
        %v619 = vunpack.c.h.b16 %v528
        %v620 = vunpack.c.l.b16 %v529
        %v621 = vunpack.c.h.b16 %v529
        %v622 = vunpack.c.l.b16 %v530
        %v623 = vunpack.c.h.b16 %v530
        %v624 = vunpack.c.l.b16 %v531
        %v625 = vunpack.c.h.b16 %v531
        %v626 = vunpack.c.l.b16 %v532
        %v627 = vunpack.c.h.b16 %v532
        %v628 = vunpack.c.l.b16 %v533
        %v629 = vunpack.c.h.b16 %v533
        %v630 = vunpack.c.l.b16 %v534
        %v631 = vunpack.c.h.b16 %v534
        %v632 = vunpack.c.l.b16 %v535
        %v633 = vunpack.c.h.b16 %v535
        %v634 = vunpack.c.l.b16 %v536
        %v635 = vunpack.c.h.b16 %v536
        %v636 = vunpack.c.l.b16 %v537
        %v637 = vunpack.c.h.b16 %v537
        %v638 = vunpack.c.l.b16 %v538
        %v639 = vunpack.c.h.b16 %v538
        %v640 = vunpack.c.l.b16 %v539
        %v641 = vunpack.c.h.b16 %v539
        %v642 = vunpack.c.l.b16 %v540
        %v643 = vunpack.c.h.b16 %v540
        %v644 = vunpack.c.l.b16 %v541
        %v645 = vunpack.c.h.b16 %v541
        %v646 = vunpack.c.l.b16 %v542
        %v647 = vunpack.c.h.b16 %v542
        %v648 = vunpack.c.l.b16 %v543
        %v649 = vunpack.c.h.b16 %v543
        %v650 = vunpack.c.l.b16 %v544
        %v651 = vunpack.c.h.b16 %v544
        %v652 = vunpack.c.l.b16 %v545
        %v653 = vunpack.c.h.b16 %v545
        %v654 = vpack.c.b16 %v592, %v590
        %v655 = vpack.c.b16 %v593, %v591
        %v656 = vpack.c.b16 %v596, %v594
        %v657 = vpack.c.b16 %v597, %v595
        %v658 = vpack.c.b16 %v600, %v598
        %v659 = vpack.c.b16 %v601, %v599
        %v660 = vpack.c.b16 %v604, %v602
        %v661 = vpack.c.b16 %v605, %v603
        %v662 = vpack.c.b16 %v608, %v606
        %v663 = vpack.c.b16 %v609, %v607
        %v664 = vpack.c.b16 %v612, %v610
        %v665 = vpack.c.b16 %v613, %v611
        %v666 = vpack.c.b16 %v616, %v614
        %v667 = vpack.c.b16 %v617, %v615
        %v668 = vpack.c.b16 %v620, %v618
        %v669 = vpack.c.b16 %v621, %v619
        %v670 = vpack.c.b16 %v624, %v622
        %v671 = vpack.c.b16 %v625, %v623
        %v672 = vpack.c.b16 %v628, %v626
        %v673 = vpack.c.b16 %v629, %v627
        %v674 = vpack.c.b16 %v632, %v630
        %v675 = vpack.c.b16 %v633, %v631
        %v676 = vpack.c.b16 %v636, %v634
        %v677 = vpack.c.b16 %v637, %v635
        %v678 = vpack.c.b16 %v640, %v638
        %v679 = vpack.c.b16 %v641, %v639
        %v680 = vpack.c.b16 %v644, %v642
        %v681 = vpack.c.b16 %v645, %v643
        %v682 = vpack.c.b16 %v648, %v646
        %v683 = vpack.c.b16 %v649, %v647
        %v684 = vpack.c.b16 %v652, %v650
        %v685 = vpack.c.b16 %v653, %v651
        %718 = vmatprep.subr.bf16.mxu0 %v655
        %719 = vmatpush1.bf16.msra.mxu0 %v654
        %720 = vmatprep.subr.bf16.mxu0 %v657
        %721 = vmatpush1.bf16.msra.mxu0 %v656
        %722 = vmatprep.subr.bf16.mxu0 %v659
        %723 = vmatpush1.bf16.msra.mxu0 %v658
        %724 = vmatprep.subr.bf16.mxu0 %v661
        %725 = vmatpush1.bf16.msra.mxu0 %v660
        %726 = vmatprep.subr.bf16.mxu0 %v663
        %727 = vmatpush1.bf16.msra.mxu0 %v662
        %728 = vmatprep.subr.bf16.mxu0 %v665
        %729 = vmatpush1.bf16.msra.mxu0 %v664
        %730 = vmatprep.subr.bf16.mxu0 %v667
        %731 = vmatpush1.bf16.msra.mxu0 %v666
        %732 = vmatprep.subr.bf16.mxu0 %v669
        %733 = vmatpush1.bf16.msra.mxu0 %v668
        %734 = vmatprep.subr.bf16.mxu0 %v671
        %735 = vmatpush1.bf16.msra.mxu0 %v670
        %736 = vmatprep.subr.bf16.mxu0 %v673
        %737 = vmatpush1.bf16.msra.mxu0 %v672
        %738 = vmatprep.subr.bf16.mxu0 %v675
        %739 = vmatpush1.bf16.msra.mxu0 %v674
        %740 = vmatprep.subr.bf16.mxu0 %v677
        %741 = vmatpush1.bf16.msra.mxu0 %v676
        %742 = vmatprep.subr.bf16.mxu0 %v679
        %743 = vmatpush1.bf16.msra.mxu0 %v678
        %744 = vmatprep.subr.bf16.mxu0 %v681
        %745 = vmatpush1.bf16.msra.mxu0 %v680
        %746 = vmatprep.subr.bf16.mxu0 %v683
        %747 = vmatpush1.bf16.msra.mxu0 %v682
        %748 = vmatprep.subr.bf16.mxu0 %v685
        %749 = vmatpush1.bf16.msra.mxu0 %v684
        %750 = vmatprep.mubr.bf16.mxu0 %v513
        %751 = vmatmul.mubr.bf16.gmra.mrb[0].mxu0 %v512
        %v752 = vpop.f32.mrb[0].mxu0
        %v753 = vadd.f32 %v551, %v752
        %v754 = vpop.f32.mrb[0].mxu0
        %v755 = vadd.f32 %v555, %v754
        %v756 = vpop.f32.mrb[0].mxu0
        %v757 = vpop.f32.mrb[0].mxu0
        %758 = vdwg.mxu0
        %v759 = vmax.f32 %v753, 0.0
        %v760 = vmax.f32 %v755, 0.0
        %v761 = vpack.c.bf16 %v759, %v759
        %v762 = vpack.c.bf16 %v760, %v760
        %v763 = vld [vmem:[#allocation8] sm:$0xff]
        %v764 = vld [vmem:[#allocation8 + $0x8] sm:$0xff]
        %v765 = vld [vmem:[#allocation8 + $0x10] sm:$0xff]
        %v766 = vld [vmem:[#allocation8 + $0x18] sm:$0xff]
        %v767 = vld [vmem:[#allocation8 + $0x20] sm:$0xff]
        %v768 = vld [vmem:[#allocation8 + $0x28] sm:$0xff]
        %v769 = vld [vmem:[#allocation8 + $0x30] sm:$0xff]
        %v770 = vld [vmem:[#allocation8 + $0x38] sm:$0xff]
        %v771 = vld [vmem:[#allocation8 + $0x40] sm:$0xff]
        %v772 = vld [vmem:[#allocation8 + $0x48] sm:$0xff]
        %v773 = vld [vmem:[#allocation8 + $0x50] sm:$0xff]
        %v774 = vld [vmem:[#allocation8 + $0x58] sm:$0xff]
        %v775 = vld [vmem:[#allocation8 + $0x60] sm:$0xff]
        %v776 = vld [vmem:[#allocation8 + $0x68] sm:$0xff]
        %v777 = vld [vmem:[#allocation8 + $0x70] sm:$0xff]
        %v778 = vld [vmem:[#allocation8 + $0x78] sm:$0xff]
        %v779 = vld [vmem:[#allocation8 + $0x80] sm:$0xff]
        %v780 = vld [vmem:[#allocation8 + $0x88] sm:$0xff]
        %v781 = vld [vmem:[#allocation8 + $0x90] sm:$0xff]
        %v782 = vld [vmem:[#allocation8 + $0x98] sm:$0xff]
        %v783 = vld [vmem:[#allocation8 + $0xa0] sm:$0xff]
        %v784 = vld [vmem:[#allocation8 + $0xa8] sm:$0xff]
        %v785 = vld [vmem:[#allocation8 + $0xb0] sm:$0xff]
        %v786 = vld [vmem:[#allocation8 + $0xb8] sm:$0xff]
        %v787 = vld [vmem:[#allocation8 + $0xc0] sm:$0xff]
        %v788 = vld [vmem:[#allocation8 + $0xc8] sm:$0xff]
        %v789 = vld [vmem:[#allocation8 + $0xd0] sm:$0xff]
        %v790 = vld [vmem:[#allocation8 + $0xd8] sm:$0xff]
        %v791 = vld [vmem:[#allocation8 + $0xe0] sm:$0xff]
        %v792 = vld [vmem:[#allocation8 + $0xe8] sm:$0xff]
        %v793 = vld [vmem:[#allocation8 + $0xf0] sm:$0xff]
        %v794 = vld [vmem:[#allocation8 + $0xf8] sm:$0xff]
        %v795 = vld [vmem:[%s5] sm:$0x3]
        %v797 = vlaneseq
        %v798 = vshrl.u32 %v797, 7
        %v799 = vsub.s32 0, %v798
        %v800 = vrot.slane %v795, %v799
        %v801 = vlaneseq
        %v802 = vshrl.u32 %v801, 7
        %v803 = vsub.s32 1, %v802
        %v804 = vrot.slane %v795, %v803
        %v839 = vunpack.c.l.b16 %v763
        %v840 = vunpack.c.h.b16 %v763
        %v841 = vunpack.c.l.b16 %v764
        %v842 = vunpack.c.h.b16 %v764
        %v843 = vunpack.c.l.b16 %v765
        %v844 = vunpack.c.h.b16 %v765
        %v845 = vunpack.c.l.b16 %v766
        %v846 = vunpack.c.h.b16 %v766
        %v847 = vunpack.c.l.b16 %v767
        %v848 = vunpack.c.h.b16 %v767
        %v849 = vunpack.c.l.b16 %v768
        %v850 = vunpack.c.h.b16 %v768
        %v851 = vunpack.c.l.b16 %v769
        %v852 = vunpack.c.h.b16 %v769
        %v853 = vunpack.c.l.b16 %v770
        %v854 = vunpack.c.h.b16 %v770
        %v855 = vunpack.c.l.b16 %v771
        %v856 = vunpack.c.h.b16 %v771
        %v857 = vunpack.c.l.b16 %v772
        %v858 = vunpack.c.h.b16 %v772
        %v859 = vunpack.c.l.b16 %v773
        %v860 = vunpack.c.h.b16 %v773
        %v861 = vunpack.c.l.b16 %v774
        %v862 = vunpack.c.h.b16 %v774
        %v863 = vunpack.c.l.b16 %v775
        %v864 = vunpack.c.h.b16 %v775
        %v865 = vunpack.c.l.b16 %v776
        %v866 = vunpack.c.h.b16 %v776
        %v867 = vunpack.c.l.b16 %v777
        %v868 = vunpack.c.h.b16 %v777
        %v869 = vunpack.c.l.b16 %v778
        %v870 = vunpack.c.h.b16 %v778
        %v871 = vunpack.c.l.b16 %v779
        %v872 = vunpack.c.h.b16 %v779
        %v873 = vunpack.c.l.b16 %v780
        %v874 = vunpack.c.h.b16 %v780
        %v875 = vunpack.c.l.b16 %v781
        %v876 = vunpack.c.h.b16 %v781
        %v877 = vunpack.c.l.b16 %v782
        %v878 = vunpack.c.h.b16 %v782
        %v879 = vunpack.c.l.b16 %v783
        %v880 = vunpack.c.h.b16 %v783
        %v881 = vunpack.c.l.b16 %v784
        %v882 = vunpack.c.h.b16 %v784
        %v883 = vunpack.c.l.b16 %v785
        %v884 = vunpack.c.h.b16 %v785
        %v885 = vunpack.c.l.b16 %v786
        %v886 = vunpack.c.h.b16 %v786
        %v887 = vunpack.c.l.b16 %v787
        %v888 = vunpack.c.h.b16 %v787
        %v889 = vunpack.c.l.b16 %v788
        %v890 = vunpack.c.h.b16 %v788
        %v891 = vunpack.c.l.b16 %v789
        %v892 = vunpack.c.h.b16 %v789
        %v893 = vunpack.c.l.b16 %v790
        %v894 = vunpack.c.h.b16 %v790
        %v895 = vunpack.c.l.b16 %v791
        %v896 = vunpack.c.h.b16 %v791
        %v897 = vunpack.c.l.b16 %v792
        %v898 = vunpack.c.h.b16 %v792
        %v899 = vunpack.c.l.b16 %v793
        %v900 = vunpack.c.h.b16 %v793
        %v901 = vunpack.c.l.b16 %v794
        %v902 = vunpack.c.h.b16 %v794
        %v903 = vpack.c.b16 %v841, %v839
        %v904 = vpack.c.b16 %v842, %v840
        %v905 = vpack.c.b16 %v845, %v843
        %v906 = vpack.c.b16 %v846, %v844
        %v907 = vpack.c.b16 %v849, %v847
        %v908 = vpack.c.b16 %v850, %v848
        %v909 = vpack.c.b16 %v853, %v851
        %v910 = vpack.c.b16 %v854, %v852
        %v911 = vpack.c.b16 %v857, %v855
        %v912 = vpack.c.b16 %v858, %v856
        %v913 = vpack.c.b16 %v861, %v859
        %v914 = vpack.c.b16 %v862, %v860
        %v915 = vpack.c.b16 %v865, %v863
        %v916 = vpack.c.b16 %v866, %v864
        %v917 = vpack.c.b16 %v869, %v867
        %v918 = vpack.c.b16 %v870, %v868
        %v919 = vpack.c.b16 %v873, %v871
        %v920 = vpack.c.b16 %v874, %v872
        %v921 = vpack.c.b16 %v877, %v875
        %v922 = vpack.c.b16 %v878, %v876
        %v923 = vpack.c.b16 %v881, %v879
        %v924 = vpack.c.b16 %v882, %v880
        %v925 = vpack.c.b16 %v885, %v883
        %v926 = vpack.c.b16 %v886, %v884
        %v927 = vpack.c.b16 %v889, %v887
        %v928 = vpack.c.b16 %v890, %v888
        %v929 = vpack.c.b16 %v893, %v891
        %v930 = vpack.c.b16 %v894, %v892
        %v931 = vpack.c.b16 %v897, %v895
        %v932 = vpack.c.b16 %v898, %v896
        %v933 = vpack.c.b16 %v901, %v899
        %v934 = vpack.c.b16 %v902, %v900
        %967 = vmatprep.subr.bf16.mxu0 %v904
        %968 = vmatpush1.bf16.msra.mxu0 %v903
        %969 = vmatprep.subr.bf16.mxu0 %v906
        %970 = vmatpush1.bf16.msra.mxu0 %v905
        %971 = vmatprep.subr.bf16.mxu0 %v908
        %972 = vmatpush1.bf16.msra.mxu0 %v907
        %973 = vmatprep.subr.bf16.mxu0 %v910
        %974 = vmatpush1.bf16.msra.mxu0 %v909
        %975 = vmatprep.subr.bf16.mxu0 %v912
        %976 = vmatpush1.bf16.msra.mxu0 %v911
        %977 = vmatprep.subr.bf16.mxu0 %v914
        %978 = vmatpush1.bf16.msra.mxu0 %v913
        %979 = vmatprep.subr.bf16.mxu0 %v916
        %980 = vmatpush1.bf16.msra.mxu0 %v915
        %981 = vmatprep.subr.bf16.mxu0 %v918
        %982 = vmatpush1.bf16.msra.mxu0 %v917
        %983 = vmatprep.subr.bf16.mxu0 %v920
        %984 = vmatpush1.bf16.msra.mxu0 %v919
        %985 = vmatprep.subr.bf16.mxu0 %v922
        %986 = vmatpush1.bf16.msra.mxu0 %v921
        %987 = vmatprep.subr.bf16.mxu0 %v924
        %988 = vmatpush1.bf16.msra.mxu0 %v923
        %989 = vmatprep.subr.bf16.mxu0 %v926
        %990 = vmatpush1.bf16.msra.mxu0 %v925
        %991 = vmatprep.subr.bf16.mxu0 %v928
        %992 = vmatpush1.bf16.msra.mxu0 %v927
        %993 = vmatprep.subr.bf16.mxu0 %v930
        %994 = vmatpush1.bf16.msra.mxu0 %v929
        %995 = vmatprep.subr.bf16.mxu0 %v932
        %996 = vmatpush1.bf16.msra.mxu0 %v931
        %997 = vmatprep.subr.bf16.mxu0 %v934
        %998 = vmatpush1.bf16.msra.mxu0 %v933
        %999 = vmatprep.mubr.bf16.mxu0 %v762
        %1000 = vmatmul.mubr.bf16.gmra.mrb[0].mxu0 %v761
        %v1001 = vpop.f32.mrb[0].mxu0
        %v1002 = vadd.f32 %v800, %v1001
        %v1003 = vpop.f32.mrb[0].mxu0
        %v1004 = vadd.f32 %v804, %v1003
        %v1005 = vpop.f32.mrb[0].mxu0
        %v1006 = vpop.f32.mrb[0].mxu0
        %1007 = vdwg.mxu0
        %v1008 = vld [vmem:[%s444] sm:$0xff]
        %v1009 = vmul.f32 %v1004, 0.5
        %v1010 = vmul.f32 %v1009, 1.442695
        %v1011 = vpow.pop %v1010
        %v1012 = vmul.f32 %v1008, %v1011
        %v1013 = vadd.f32 %v1002, %v1012
        %v1014 = vpack.c.bf16 %v1013, %v1013
        %v1015 = vld [vmem:[#allocation10] sm:$0xff]
        %v1016 = vld [vmem:[#allocation10 + $0x8] sm:$0xff]
        %v1017 = vld [vmem:[#allocation10 + $0x10] sm:$0xff]
        %v1018 = vld [vmem:[#allocation10 + $0x18] sm:$0xff]
        %v1019 = vld [vmem:[#allocation10 + $0x20] sm:$0xff]
        %v1020 = vld [vmem:[#allocation10 + $0x28] sm:$0xff]
        %v1021 = vld [vmem:[#allocation10 + $0x30] sm:$0xff]
        %v1022 = vld [vmem:[#allocation10 + $0x38] sm:$0xff]
        %v1023 = vld [vmem:[#allocation10 + $0x40] sm:$0xff]
        %v1024 = vld [vmem:[#allocation10 + $0x48] sm:$0xff]
        %v1025 = vld [vmem:[#allocation10 + $0x50] sm:$0xff]
        %v1026 = vld [vmem:[#allocation10 + $0x58] sm:$0xff]
        %v1027 = vld [vmem:[#allocation10 + $0x60] sm:$0xff]
        %v1028 = vld [vmem:[#allocation10 + $0x68] sm:$0xff]
        %v1029 = vld [vmem:[#allocation10 + $0x70] sm:$0xff]
        %v1030 = vld [vmem:[#allocation10 + $0x78] sm:$0xff]
        %v1031 = vld [vmem:[%s7] sm:$0x3]
        %v1033 = vlaneseq
        %v1034 = vshrl.u32 %v1033, 7
        %v1035 = vsub.s32 0, %v1034
        %v1036 = vrot.slane %v1031, %v1035
        %v1037 = vlaneseq
        %v1038 = vshrl.u32 %v1037, 7
        %v1039 = vsub.s32 1, %v1038
        %v1040 = vrot.slane %v1031, %v1039
        %v1059 = vunpack.c.l.b16 %v1015
        %v1060 = vunpack.c.h.b16 %v1015
        %v1061 = vunpack.c.l.b16 %v1016
        %v1062 = vunpack.c.h.b16 %v1016
        %v1063 = vunpack.c.l.b16 %v1017
        %v1064 = vunpack.c.h.b16 %v1017
        %v1065 = vunpack.c.l.b16 %v1018
        %v1066 = vunpack.c.h.b16 %v1018
        %v1067 = vunpack.c.l.b16 %v1019
        %v1068 = vunpack.c.h.b16 %v1019
        %v1069 = vunpack.c.l.b16 %v1020
        %v1070 = vunpack.c.h.b16 %v1020
        %v1071 = vunpack.c.l.b16 %v1021
        %v1072 = vunpack.c.h.b16 %v1021
        %v1073 = vunpack.c.l.b16 %v1022
        %v1074 = vunpack.c.h.b16 %v1022
        %v1075 = vunpack.c.l.b16 %v1023
        %v1076 = vunpack.c.h.b16 %v1023
        %v1077 = vunpack.c.l.b16 %v1024
        %v1078 = vunpack.c.h.b16 %v1024
        %v1079 = vunpack.c.l.b16 %v1025
        %v1080 = vunpack.c.h.b16 %v1025
        %v1081 = vunpack.c.l.b16 %v1026
        %v1082 = vunpack.c.h.b16 %v1026
        %v1083 = vunpack.c.l.b16 %v1027
        %v1084 = vunpack.c.h.b16 %v1027
        %v1085 = vunpack.c.l.b16 %v1028
        %v1086 = vunpack.c.h.b16 %v1028
        %v1087 = vunpack.c.l.b16 %v1029
        %v1088 = vunpack.c.h.b16 %v1029
        %v1089 = vunpack.c.l.b16 %v1030
        %v1090 = vunpack.c.h.b16 %v1030
        %v1091 = vpack.c.b16 %v1061, %v1059
        %v1092 = vpack.c.b16 %v1062, %v1060
        %v1093 = vpack.c.b16 %v1065, %v1063
        %v1094 = vpack.c.b16 %v1066, %v1064
        %v1095 = vpack.c.b16 %v1069, %v1067
        %v1096 = vpack.c.b16 %v1070, %v1068
        %v1097 = vpack.c.b16 %v1073, %v1071
        %v1098 = vpack.c.b16 %v1074, %v1072
        %v1099 = vpack.c.b16 %v1077, %v1075
        %v1100 = vpack.c.b16 %v1078, %v1076
        %v1101 = vpack.c.b16 %v1081, %v1079
        %v1102 = vpack.c.b16 %v1082, %v1080
        %v1103 = vpack.c.b16 %v1085, %v1083
        %v1104 = vpack.c.b16 %v1086, %v1084
        %v1105 = vpack.c.b16 %v1089, %v1087
        %v1106 = vpack.c.b16 %v1090, %v1088
        %1123 = vmatprep.subr.bf16.mxu0 %v1092
        %1124 = vmatpush1.bf16.msra.mxu0 %v1091
        %1125 = vmatprep.subr.bf16.mxu0 %v1094
        %1126 = vmatpush1.bf16.msra.mxu0 %v1093
        %1127 = vmatprep.subr.bf16.mxu0 %v1096
        %1128 = vmatpush1.bf16.msra.mxu0 %v1095
        %1129 = vmatprep.subr.bf16.mxu0 %v1098
        %1130 = vmatpush1.bf16.msra.mxu0 %v1097
        %1131 = vmatprep.subr.bf16.mxu0 %v1100
        %1132 = vmatpush1.bf16.msra.mxu0 %v1099
        %1133 = vmatprep.subr.bf16.mxu0 %v1102
        %1134 = vmatpush1.bf16.msra.mxu0 %v1101
        %1135 = vmatprep.subr.bf16.mxu0 %v1104
        %1136 = vmatpush1.bf16.msra.mxu0 %v1103
        %1137 = vmatprep.subr.bf16.mxu0 %v1106
        %1138 = vmatpush1.bf16.msra.mxu0 %v1105
        %1139 = vmatprep.subr.bf16.mxu0 0
        %1140 = vmatpush1.bf16.msra.mxu0 0
        %1141 = vmatprep.subr.bf16.mxu0 0
        %1142 = vmatpush1.bf16.msra.mxu0 0
        %1143 = vmatprep.subr.bf16.mxu0 0
        %1144 = vmatpush1.bf16.msra.mxu0 0
        %1145 = vmatprep.subr.bf16.mxu0 0
        %1146 = vmatpush1.bf16.msra.mxu0 0
        %1147 = vmatprep.subr.bf16.mxu0 0
        %1148 = vmatpush1.bf16.msra.mxu0 0
        %1149 = vmatprep.subr.bf16.mxu0 0
        %1150 = vmatpush1.bf16.msra.mxu0 0
        %1151 = vmatprep.subr.bf16.mxu0 0
        %1152 = vmatpush1.bf16.msra.mxu0 0
        %1153 = vmatprep.subr.bf16.mxu0 0
        %1154 = vmatpush1.bf16.msra.mxu0 0
        %1155 = vmatprep.mubr.bf16.mxu0 0
        %1156 = vmatmul.mubr.bf16.gmra.mrb[0].mxu0 %v1014
        %v1157 = vpop.f32.mrb[0].mxu0
        %v1158 = vadd.f32 %v1036, %v1157
        %v1159 = vpop.f32.mrb[0].mxu0
        %v1160 = vadd.f32 %v1040, %v1159
        %v1161 = vpop.f32.mrb[0].mxu0
        %v1162 = vpop.f32.mrb[0].mxu0
        %1163 = vdwg.mxu0
        %v1164 = vmax.f32 %v1158, 0.0
        %v1165 = vmax.f32 %v1160, 0.0
        %v1166 = vpack.c.bf16 %v1164, %v1164
        %v1167 = vpack.c.bf16 %v1165, %v1165
        %v1168 = vld [vmem:[#allocation11] sm:$0xff]
        %v1169 = vld [vmem:[#allocation11 + $0x8] sm:$0xff]
        %v1170 = vld [vmem:[#allocation11 + $0x10] sm:$0xff]
        %v1171 = vld [vmem:[#allocation11 + $0x18] sm:$0xff]
        %v1172 = vld [vmem:[#allocation11 + $0x20] sm:$0xff]
        %v1173 = vld [vmem:[#allocation11 + $0x28] sm:$0xff]
        %v1174 = vld [vmem:[#allocation11 + $0x30] sm:$0xff]
        %v1175 = vld [vmem:[#allocation11 + $0x38] sm:$0xff]
        %v1176 = vld [vmem:[#allocation11 + $0x40] sm:$0xff]
        %v1177 = vld [vmem:[#allocation11 + $0x48] sm:$0xff]
        %v1178 = vld [vmem:[#allocation11 + $0x50] sm:$0xff]
        %v1179 = vld [vmem:[#allocation11 + $0x58] sm:$0xff]
        %v1180 = vld [vmem:[#allocation11 + $0x60] sm:$0xff]
        %v1181 = vld [vmem:[#allocation11 + $0x68] sm:$0xff]
        %v1182 = vld [vmem:[#allocation11 + $0x70] sm:$0xff]
        %v1183 = vld [vmem:[#allocation11 + $0x78] sm:$0xff]
        %v1184 = vld [vmem:[#allocation11 + $0x80] sm:$0xff]
        %v1185 = vld [vmem:[#allocation11 + $0x88] sm:$0xff]
        %v1186 = vld [vmem:[#allocation11 + $0x90] sm:$0xff]
        %v1187 = vld [vmem:[#allocation11 + $0x98] sm:$0xff]
        %v1188 = vld [vmem:[#allocation11 + $0xa0] sm:$0xff]
        %v1189 = vld [vmem:[#allocation11 + $0xa8] sm:$0xff]
        %v1190 = vld [vmem:[#allocation11 + $0xb0] sm:$0xff]
        %v1191 = vld [vmem:[#allocation11 + $0xb8] sm:$0xff]
        %v1192 = vld [vmem:[#allocation11 + $0xc0] sm:$0xff]
        %v1193 = vld [vmem:[#allocation11 + $0xc8] sm:$0xff]
        %v1194 = vld [vmem:[#allocation11 + $0xd0] sm:$0xff]
        %v1195 = vld [vmem:[#allocation11 + $0xd8] sm:$0xff]
        %v1196 = vld [vmem:[#allocation11 + $0xe0] sm:$0xff]
        %v1197 = vld [vmem:[#allocation11 + $0xe8] sm:$0xff]
        %v1198 = vld [vmem:[#allocation11 + $0xf0] sm:$0xff]
        %v1199 = vld [vmem:[#allocation11 + $0xf8] sm:$0xff]
        %v1200 = vld [vmem:[%s9] sm:$0x3]
        %v1202 = vlaneseq
        %v1203 = vshrl.u32 %v1202, 7
        %v1204 = vsub.s32 0, %v1203
        %v1205 = vrot.slane %v1200, %v1204
        %v1206 = vlaneseq
        %v1207 = vshrl.u32 %v1206, 7
        %v1208 = vsub.s32 1, %v1207
        %v1209 = vrot.slane %v1200, %v1208
        %v1244 = vunpack.c.l.b16 %v1168
        %v1245 = vunpack.c.h.b16 %v1168
        %v1246 = vunpack.c.l.b16 %v1169
        %v1247 = vunpack.c.h.b16 %v1169
        %v1248 = vunpack.c.l.b16 %v1170
        %v1249 = vunpack.c.h.b16 %v1170
        %v1250 = vunpack.c.l.b16 %v1171
        %v1251 = vunpack.c.h.b16 %v1171
        %v1252 = vunpack.c.l.b16 %v1172
        %v1253 = vunpack.c.h.b16 %v1172
        %v1254 = vunpack.c.l.b16 %v1173
        %v1255 = vunpack.c.h.b16 %v1173
        %v1256 = vunpack.c.l.b16 %v1174
        %v1257 = vunpack.c.h.b16 %v1174
        %v1258 = vunpack.c.l.b16 %v1175
        %v1259 = vunpack.c.h.b16 %v1175
        %v1260 = vunpack.c.l.b16 %v1176
        %v1261 = vunpack.c.h.b16 %v1176
        %v1262 = vunpack.c.l.b16 %v1177
        %v1263 = vunpack.c.h.b16 %v1177
        %v1264 = vunpack.c.l.b16 %v1178
        %v1265 = vunpack.c.h.b16 %v1178
        %v1266 = vunpack.c.l.b16 %v1179
        %v1267 = vunpack.c.h.b16 %v1179
        %v1268 = vunpack.c.l.b16 %v1180
        %v1269 = vunpack.c.h.b16 %v1180
        %v1270 = vunpack.c.l.b16 %v1181
        %v1271 = vunpack.c.h.b16 %v1181
        %v1272 = vunpack.c.l.b16 %v1182
        %v1273 = vunpack.c.h.b16 %v1182
        %v1274 = vunpack.c.l.b16 %v1183
        %v1275 = vunpack.c.h.b16 %v1183
        %v1276 = vunpack.c.l.b16 %v1184
        %v1277 = vunpack.c.h.b16 %v1184
        %v1278 = vunpack.c.l.b16 %v1185
        %v1279 = vunpack.c.h.b16 %v1185
        %v1280 = vunpack.c.l.b16 %v1186
        %v1281 = vunpack.c.h.b16 %v1186
        %v1282 = vunpack.c.l.b16 %v1187
        %v1283 = vunpack.c.h.b16 %v1187
        %v1284 = vunpack.c.l.b16 %v1188
        %v1285 = vunpack.c.h.b16 %v1188
        %v1286 = vunpack.c.l.b16 %v1189
        %v1287 = vunpack.c.h.b16 %v1189
        %v1288 = vunpack.c.l.b16 %v1190
        %v1289 = vunpack.c.h.b16 %v1190
        %v1290 = vunpack.c.l.b16 %v1191
        %v1291 = vunpack.c.h.b16 %v1191
        %v1292 = vunpack.c.l.b16 %v1192
        %v1293 = vunpack.c.h.b16 %v1192
        %v1294 = vunpack.c.l.b16 %v1193
        %v1295 = vunpack.c.h.b16 %v1193
        %v1296 = vunpack.c.l.b16 %v1194
        %v1297 = vunpack.c.h.b16 %v1194
        %v1298 = vunpack.c.l.b16 %v1195
        %v1299 = vunpack.c.h.b16 %v1195
        %v1300 = vunpack.c.l.b16 %v1196
        %v1301 = vunpack.c.h.b16 %v1196
        %v1302 = vunpack.c.l.b16 %v1197
        %v1303 = vunpack.c.h.b16 %v1197
        %v1304 = vunpack.c.l.b16 %v1198
        %v1305 = vunpack.c.h.b16 %v1198
        %v1306 = vunpack.c.l.b16 %v1199
        %v1307 = vunpack.c.h.b16 %v1199
        %v1308 = vpack.c.b16 %v1246, %v1244
        %v1309 = vpack.c.b16 %v1247, %v1245
        %v1310 = vpack.c.b16 %v1250, %v1248
        %v1311 = vpack.c.b16 %v1251, %v1249
        %v1312 = vpack.c.b16 %v1254, %v1252
        %v1313 = vpack.c.b16 %v1255, %v1253
        %v1314 = vpack.c.b16 %v1258, %v1256
        %v1315 = vpack.c.b16 %v1259, %v1257
        %v1316 = vpack.c.b16 %v1262, %v1260
        %v1317 = vpack.c.b16 %v1263, %v1261
        %v1318 = vpack.c.b16 %v1266, %v1264
        %v1319 = vpack.c.b16 %v1267, %v1265
        %v1320 = vpack.c.b16 %v1270, %v1268
        %v1321 = vpack.c.b16 %v1271, %v1269
        %v1322 = vpack.c.b16 %v1274, %v1272
        %v1323 = vpack.c.b16 %v1275, %v1273
        %v1324 = vpack.c.b16 %v1278, %v1276
        %v1325 = vpack.c.b16 %v1279, %v1277
        %v1326 = vpack.c.b16 %v1282, %v1280
        %v1327 = vpack.c.b16 %v1283, %v1281
        %v1328 = vpack.c.b16 %v1286, %v1284
        %v1329 = vpack.c.b16 %v1287, %v1285
        %v1330 = vpack.c.b16 %v1290, %v1288
        %v1331 = vpack.c.b16 %v1291, %v1289
        %v1332 = vpack.c.b16 %v1294, %v1292
        %v1333 = vpack.c.b16 %v1295, %v1293
        %v1334 = vpack.c.b16 %v1298, %v1296
        %v1335 = vpack.c.b16 %v1299, %v1297
        %v1336 = vpack.c.b16 %v1302, %v1300
        %v1337 = vpack.c.b16 %v1303, %v1301
        %v1338 = vpack.c.b16 %v1306, %v1304
        %v1339 = vpack.c.b16 %v1307, %v1305
        %1372 = vmatprep.subr.bf16.mxu0 %v1309
        %1373 = vmatpush1.bf16.msra.mxu0 %v1308
        %1374 = vmatprep.subr.bf16.mxu0 %v1311
        %1375 = vmatpush1.bf16.msra.mxu0 %v1310
        %1376 = vmatprep.subr.bf16.mxu0 %v1313
        %1377 = vmatpush1.bf16.msra.mxu0 %v1312
        %1378 = vmatprep.subr.bf16.mxu0 %v1315
        %1379 = vmatpush1.bf16.msra.mxu0 %v1314
        %1380 = vmatprep.subr.bf16.mxu0 %v1317
        %1381 = vmatpush1.bf16.msra.mxu0 %v1316
        %1382 = vmatprep.subr.bf16.mxu0 %v1319
        %1383 = vmatpush1.bf16.msra.mxu0 %v1318
        %1384 = vmatprep.subr.bf16.mxu0 %v1321
        %1385 = vmatpush1.bf16.msra.mxu0 %v1320
        %1386 = vmatprep.subr.bf16.mxu0 %v1323
        %1387 = vmatpush1.bf16.msra.mxu0 %v1322
        %1388 = vmatprep.subr.bf16.mxu0 %v1325
        %1389 = vmatpush1.bf16.msra.mxu0 %v1324
        %1390 = vmatprep.subr.bf16.mxu0 %v1327
        %1391 = vmatpush1.bf16.msra.mxu0 %v1326
        %1392 = vmatprep.subr.bf16.mxu0 %v1329
        %1393 = vmatpush1.bf16.msra.mxu0 %v1328
        %1394 = vmatprep.subr.bf16.mxu0 %v1331
        %1395 = vmatpush1.bf16.msra.mxu0 %v1330
        %1396 = vmatprep.subr.bf16.mxu0 %v1333
        %1397 = vmatpush1.bf16.msra.mxu0 %v1332
        %1398 = vmatprep.subr.bf16.mxu0 %v1335
        %1399 = vmatpush1.bf16.msra.mxu0 %v1334
        %1400 = vmatprep.subr.bf16.mxu0 %v1337
        %1401 = vmatpush1.bf16.msra.mxu0 %v1336
        %1402 = vmatprep.subr.bf16.mxu0 %v1339
        %1403 = vmatpush1.bf16.msra.mxu0 %v1338
        %1404 = vmatprep.mubr.bf16.mxu0 %v1167
        %1405 = vmatmul.mubr.bf16.gmra.mrb[0].mxu0 %v1166
        %v1406 = vpop.f32.mrb[0].mxu0
        %v1407 = vadd.f32 %v1205, %v1406
        %v1408 = vpop.f32.mrb[0].mxu0
        %v1409 = vadd.f32 %v1209, %v1408
        %v1410 = vpop.f32.mrb[0].mxu0
        %v1411 = vpop.f32.mrb[0].mxu0
        %1412 = vdwg.mxu0
        %v1413 = vxor.u32 %v1407, 2147483648
        %v1414 = vxor.u32 %v1409, 2147483648
        %v1415 = vmul.f32 %v1413, 1.442695
        %v1416 = vpow.pop %v1415
        %v1417 = vmul.f32 %v1414, 1.442695
        %v1418 = vpow.pop %v1417
        %v1419 = vadd.f32 %v1416, 1.0
        %v1420 = vadd.f32 %v1418, 1.0
        %v1421 = vrcp.pop %v1419
        %v1422 = vmul.f32 1.0, %v1421
        %v1423 = vrcp.pop %v1420
        %v1424 = vmul.f32 1.0, %v1423
        %1425 = vst [vmem:[%s501] sm:$0xff] %v1422
        %1426 = vst [vmem:[%s501 + $0x8] sm:$0xff] %v1424
        %1427 = vst [vmem:[%s508] sm:$0xff] %v1002
        %1428 = vst [vmem:[%s508 + $0x8] sm:$0xff] %v1004
        %s1429 = sand.u32 %s265, 1
        %s1430 = scalar_lea.sflag [#allocation4], %s1429
        %s1431 = sand.u32 %s265, 1
        %s1432 = smul.addr %s1431, 16
        %s1433 = scalar_lea.vmem [#allocation13], %s1432
        %s1434 = sand.u32 %s291, 1
        %s1435 = scalar_lea.sflag [#allocation15], %s1434
        %s1436 = sand.u32 %s291, 1
        %s1437 = smul.addr %s1436, 16
        %s1438 = scalar_lea.vmem [#allocation14], %s1437
        // Predicated region
        $region85: #{vae_forward_padded.1} parent=59 // pred_check
          %p1439 = pneg %p275
        $region86: #{vae_forward_padded.1} parent=59 // pred_check_branch
          %1441 = sbr.rel (%p1439) target = $region88
        $region87: #{vae_forward_padded.1} parent=59 // pred_region
          %s1443 = ssub.s32 256, 256
          %1444 = vsyncadd %s1430, %s1443
          %s1445 = smul.addr %s37, 2
          %s1446 = smul.addr %s1445, 128
          %s1447 = scalar_lea.hbm %s10, %s1446
          %s1449 = sshll.u32 %s1433, 4
          %s1450 = int_to_ptr.vmem [resolvable:$true] %s1449
          %1452 = dma.vmem_to_hbm [thread:$0]  %s1450, 256, %s1447, %s1430
        $region88: #{vae_forward_padded.1} parent=59 // pred_fallthru
          _
        // Predicated region
        $region89: #{vae_forward_padded.1} parent=59 // pred_check
          %p1453 = pneg %p301
        $region90: #{vae_forward_padded.1} parent=59 // pred_check_branch
          %1455 = sbr.rel (%p1453) target = $region92
        $region91: #{vae_forward_padded.1} parent=59 // pred_region
          %s1457 = ssub.s32 256, 256
          %1458 = vsyncadd %s1435, %s1457
          %s1459 = smul.addr %s37, 2
          %s1460 = smul.addr %s1459, 128
          %s1461 = scalar_lea.hbm %s11, %s1460
          %s1463 = sshll.u32 %s1438, 4
          %s1464 = int_to_ptr.vmem [resolvable:$true] %s1463
          %1466 = dma.vmem_to_hbm [thread:$0]  %s1464, 256, %s1461, %s1435
        $region92: #{vae_forward_padded.1} parent=59 // pred_fallthru
          _
      $region60: #{vae_forward_padded.1} parent=5 // pred_fallthru
        _
      %p1467 = scmp.le.s32.totalorder 2, %s32
      // Predicated region
      $region93: #{vae_forward_padded.1} parent=5 // pred_check
        %p1468 = pneg %p1467
      $region94: #{vae_forward_padded.1} parent=5 // pred_check_branch
        %1470 = sbr.rel (%p1468) target = $region96
      $region95: #{vae_forward_padded.1} parent=5 // pred_region
        %s1471 = ssub.s32 %s32, 2
        // Predicated region
        $region97: #{vae_forward_padded.1} parent=95 // pred_check
          %p1472 = pneg %p281
        $region98: #{vae_forward_padded.1} parent=95 // pred_check_branch
          %1474 = sbr.rel (%p1472) target = $region100
        $region99: #{vae_forward_padded.1} parent=95 // pred_region
          %s1475 = sand.u32 %s266, 1
          %s1476 = scalar_lea.sflag [#allocation4], %s1475
          %s1477 = sand.u32 %s266, 1
          %s1478 = smul.addr %s1477, 16
          %s1479 = scalar_lea.vmem [#allocation13], %s1478
          %1480 = dma.done %s1476, 256
        $region100: #{vae_forward_padded.1} parent=95 // pred_fallthru
          _
        // Predicated region
        $region101: #{vae_forward_padded.1} parent=95 // pred_check
          %p1481 = pneg %p307
        $region102: #{vae_forward_padded.1} parent=95 // pred_check_branch
          %1483 = sbr.rel (%p1481) target = $region104
        $region103: #{vae_forward_padded.1} parent=95 // pred_region
          %s1484 = sand.u32 %s292, 1
          %s1485 = scalar_lea.sflag [#allocation15], %s1484
          %s1486 = sand.u32 %s292, 1
          %s1487 = smul.addr %s1486, 16
          %s1488 = scalar_lea.vmem [#allocation14], %s1487
          %1489 = dma.done %s1485, 256
        $region104: #{vae_forward_padded.1} parent=95 // pred_fallthru
          _
      $region96: #{vae_forward_padded.1} parent=5 // pred_fallthru
        _
    $region6: #{vae_forward_padded.1} parent=1 // loop_footer
      %s36 = sadd.s32 1, %s32
    $region7: #{vae_forward_padded.1} parent=1 // loop_footer_branch
      %31 = sbr.rel target = $region3
    $region8: #{vae_forward_padded.1} parent=1 // loop_exit
      _
    %1490 = vsyncpa [#allocation3], 1
    %s1491 = scalar_lea.sflag [#allocation3], 1
    %1492 = vsyncpa %s1491, 1
    %1493 = vsyncpa [#allocation6], 1
    %s1494 = scalar_lea.sflag [#allocation6], 1
    %1495 = vsyncpa %s1494, 1
    %1496 = vsyncpa [#allocation9], 1
    %1497 = vsyncpa [#allocation12], 1
    %1498 = vsyncpa [#allocation4], 1
    %s1499 = scalar_lea.sflag [#allocation4], 1
    %1500 = vsyncpa %s1499, 1
    %1501 = vsyncpa [#allocation15], 1
    %s1502 = scalar_lea.sflag [#allocation15], 1
    %1503 = vsyncpa %s1502, 1

</llo_original>
